<compile_context>
chip_gen: v7x
topology: tpu7x:2x2x1
jax: 0.10.0
libtpu: 0.0.40
codegen_flags: <defaults>
</compile_context>

<pallas_src>
import jax
import jax.numpy as jnp
from jax.experimental import pallas as pl
from jax.experimental.pallas import tpu as pltpu


# ----------------------------- configuration -----------------------------
FEATURES = ("age", "gender")          # args.features -> 2 classifier heads
NUM_HEADS = len(FEATURES)
RESNET_OUT = 400                      # r3d_18.fc.out_features (logical)
F2 = RESNET_OUT // 2                  # 200
F4 = F2 // 2                          # 100 (ClassifierHead hidden)

LANE = 128
TK = 512                              # K-tile for the backbone contraction


def _pad_to(n, m):
    return ((n + m - 1) // m) * m


ROUT_P = _pad_to(RESNET_OUT, LANE)    # 512
F2_P = _pad_to(F2, LANE)              # 256
F4_P = _pad_to(F4, LANE)              # 128
OUT_P = LANE                          # lane-dense output, sliced to 2 heads


# ------------------------------ fused kernel ------------------------------
def _fused_kernel(x_ref, weff_ref, bb_ref,
                  w1_ref, b1_ref, w2_ref, b2_ref,
                  wh1_ref, bh1_ref, wh2_ref, bh2_ref,
                  out_ref, acc_ref):
    # x_ref    : (B, TK) bf16          k-th slice of flattened raw input
    # weff_ref : (TK, ROUT_P) bf16     k-th slice of stem-folded backbone wt
    # bb_ref   : (1, ROUT_P) f32       stem-folded backbone bias
    # w1/w2/wh1/wh2 : bf16 [in, out] padded weights, resident across k
    # b1/b2/bh1/bh2 : f32 (1, out) padded biases
    # out_ref  : (B, OUT_P) f32        padded head logits (written at last k)
    # acc_ref  : (B, ROUT_P) f32       backbone accumulator (persists over k)
    k = pl.program_id(0)

    @pl.when(k == 0)
    def _():
        acc_ref[...] = jnp.zeros_like(acc_ref)

    # backbone stand-in contraction, K-tiled / pipelined
    acc_ref[...] += jnp.dot(x_ref[...], weff_ref[...],
                            preferred_element_type=jnp.float32)

    @pl.when(k == pl.num_programs(0) - 1)
    def _():
        def dense(x_f32, w_ref, b_ref):
            y = jnp.dot(x_f32.astype(jnp.bfloat16), w_ref[...],
                        preferred_element_type=jnp.float32)
            return y + b_ref[...]

        feat = acc_ref[...] + bb_ref[...]                    # stem+backbone
        h = jnp.maximum(dense(feat, w1_ref, b1_ref), 0.0)    # relu(x1); dropout=id
        h = jnp.maximum(dense(h, w2_ref, b2_ref), 0.0)       # relu(x2); dropout=id
        z = dense(h, wh1_ref, bh1_ref)                       # heads .x1 (stacked)
        out_ref[...] = dense(z, wh2_ref, bh2_ref)            # heads .x2 (block-diag)


# -------------------------------- forward --------------------------------
def mt_classifier_3d_forward(x, params):
    """x: NCDHW [B, 1, D, H, W] float32 -> list of [B, 1] head predictions."""
    B, C, D, H, W = x.shape
    assert C == 1
    K = D * H * W
    Kp = params["weff"].shape[0]          # K padded to a multiple of TK
    nk = Kp // TK

    # Raw flatten only (stem is folded into weff); cast to bf16 once here.
    x_flat = x.reshape(B, K).astype(jnp.bfloat16)
    if Kp != K:
        x_flat = jnp.pad(x_flat, ((0, 0), (0, Kp - K)))

    const = lambda k: (0, 0)              # resident (never re-DMA'd) blocks
    grid_spec = pltpu.PrefetchScalarGridSpec(
        num_scalar_prefetch=0,
        grid=(nk,),
        in_specs=[
            pl.BlockSpec((B, TK), lambda k: (0, k)),          # x slice
            pl.BlockSpec((TK, ROUT_P), lambda k: (k, 0)),     # weff slice
            pl.BlockSpec((1, ROUT_P), const),                 # bb
            pl.BlockSpec((ROUT_P, ROUT_P), const),            # w1
            pl.BlockSpec((1, ROUT_P), const),                 # b1
            pl.BlockSpec((ROUT_P, F2_P), const),              # w2
            pl.BlockSpec((1, F2_P), const),                   # b2
            pl.BlockSpec((F2_P, NUM_HEADS * F4_P), const),    # wh1
            pl.BlockSpec((1, NUM_HEADS * F4_P), const),       # bh1
            pl.BlockSpec((NUM_HEADS * F4_P, OUT_P), const),   # wh2
            pl.BlockSpec((1, OUT_P), const),                  # bh2
        ],
        out_specs=pl.BlockSpec((B, OUT_P), const),
        scratch_shapes=[pltpu.VMEM((B, ROUT_P), jnp.float32)],
    )

    out = pl.pallas_call(
        _fused_kernel,
        out_shape=jax.ShapeDtypeStruct((B, OUT_P), jnp.float32),
        grid_spec=grid_spec,
        compiler_params=pltpu.CompilerParams(
            dimension_semantics=("arbitrary",),
            vmem_limit_bytes=32 * 1024 * 1024),
    )(x_flat, params["weff"], params["bb"],
      params["w1"], params["b1"], params["w2"], params["b2"],
      params["wh1"], params["bh1"], params["wh2"], params["bh2"])

    # list of [B, 1] head predictions, matching the PyTorch return value
    return [out[:, i:i + 1] for i in range(NUM_HEADS)]


# ----------------------------- parameter init -----------------------------
def _kaiming_normal(key, out_f, in_f):
    std = jnp.sqrt(2.0 / in_f)
    return jax.random.normal(key, (out_f, in_f), jnp.float32) * std


def init_params(key, D, H, W):
    HW = H * W
    K3 = 3 * D * HW                    # torch flatten length after the stem
    Kp = _pad_to(D * HW, TK)           # raw-input contraction length, padded
    ks = jax.random.split(key, 9)
    p = {}

    # stem Conv3d(1, 3, (1,3,3), padding=(0,1,1))
    stem_w = jax.random.normal(ks[0], (3, 3, 3), jnp.float32) * 0.1   # [oc,kh,kw]
    stem_b = jax.random.normal(ks[1], (3,), jnp.float32) * 0.01

    # backbone stand-in Linear(K3 -> RESNET_OUT)   (see TODO(synk) above)
    wb = _kaiming_normal(ks[2], RESNET_OUT, K3)                       # [out, in]
    bbv = jax.random.normal(ks[3], (RESNET_OUT,), jnp.float32) * 0.01

    # ---- fold the linear stem into the backbone weight / bias ----
    # wb_r[oc, d, h, w, :] is the backbone coefficient of stem output (oc,d,h,w)
    wb_r = wb.T.reshape(3, D, H, W, RESNET_OUT)
    wb_pad = jnp.pad(wb_r, ((0, 0), (0, 0), (1, 1), (1, 1), (0, 0)))
    w_eff = jnp.zeros((D, H, W, RESNET_OUT), jnp.float32)
    for oc in range(3):
        for kh in range(3):
            for kw in range(3):
                w_eff = w_eff + stem_w[oc, kh, kw] * \
                    wb_pad[oc, :, 2 - kh:2 - kh + H, 2 - kw:2 - kw + W, :]
    w_eff = w_eff.reshape(D * HW, RESNET_OUT)
    bb_eff = bbv + jnp.einsum("o,oc->c", stem_b, wb_r.sum(axis=(1, 2, 3)))

    weff = jnp.zeros((Kp, ROUT_P), jnp.float32)
    weff = weff.at[:D * HW, :RESNET_OUT].set(w_eff)
    p["weff"] = weff.astype(jnp.bfloat16)
    p["bb"] = jnp.zeros((1, ROUT_P), jnp.float32).at[0, :RESNET_OUT].set(bb_eff)

    def pack(w_out_in, bias, in_p, out_p):
        # torch [out, in] weight -> zero-padded [in_p, out_p] bf16, bias (1, out_p) f32
        o, i = w_out_in.shape
        w = jnp.zeros((in_p, out_p), jnp.float32).at[:i, :o].set(w_out_in.T)
        b = jnp.zeros((1, out_p), jnp.float32).at[0, :o].set(bias)
        return w.astype(jnp.bfloat16), b

    # x1: Linear(RESNET_OUT, RESNET_OUT)
    p["w1"], p["b1"] = pack(_kaiming_normal(ks[4], RESNET_OUT, RESNET_OUT),
                            jax.random.normal(ks[5], (RESNET_OUT,), jnp.float32) * 0.01,
                            ROUT_P, ROUT_P)
    # x2: Linear(RESNET_OUT, RESNET_OUT // 2)
    p["w2"], p["b2"] = pack(_kaiming_normal(ks[6], F2, RESNET_OUT),
                            jax.random.normal(ks[7], (F2,), jnp.float32) * 0.01,
                            ROUT_P, F2_P)

    # ClassifierHeads: first linears stacked column-wise, second linears
    # block-diagonal into a 128-lane-padded output so both heads are two
    # fused matmuls (no ReLU between head.x1 and head.x2, matching PyTorch).
    wh1 = jnp.zeros((F2_P, NUM_HEADS * F4_P), jnp.float32)
    bh1 = jnp.zeros((1, NUM_HEADS * F4_P), jnp.float32)
    wh2 = jnp.zeros((NUM_HEADS * F4_P, OUT_P), jnp.float32)
    bh2 = jnp.zeros((1, OUT_P), jnp.float32)
    hk = jax.random.split(ks[8], NUM_HEADS * 4)
    for i in range(NUM_HEADS):
        w1h = _kaiming_normal(hk[4 * i + 0], F4, F2)                 # [F4, F2]
        b1h = jax.random.normal(hk[4 * i + 1], (F4,), jnp.float32) * 0.01
        w2h = _kaiming_normal(hk[4 * i + 2], 1, F4)                  # [1, F4]
        b2h = jax.random.normal(hk[4 * i + 3], (1,), jnp.float32) * 0.01
        c = i * F4_P
        wh1 = wh1.at[:F2, c:c + F4].set(w1h.T)
        bh1 = bh1.at[0, c:c + F4].set(b1h)
        wh2 = wh2.at[c:c + F4, i].set(w2h[0])
        bh2 = bh2.at[0, i].set(b2h[0])
    p["wh1"], p["bh1"] = wh1.astype(jnp.bfloat16), bh1
    p["wh2"], p["bh2"] = wh2.astype(jnp.bfloat16), bh2
    return p


if __name__ == "__main__":
    B, D, H, W = 2, 4, 16, 16
    key = jax.random.PRNGKey(0)
    kx, kp = jax.random.split(key)
    x = jax.random.normal(kx, (B, 1, D, H, W), jnp.float32)
    params = init_params(kp, D, H, W)

    preds = jax.jit(mt_classifier_3d_forward)(x, params)
    preds = jax.block_until_ready(preds)

    assert len(preds) == NUM_HEADS
    for pr in preds:
        assert pr.shape == (B, 1) and pr.dtype == jnp.float32
        assert bool(jnp.all(jnp.isfinite(pr)))
    print("KERNEL_OK")
</pallas_src>

<mosaic_0001>
module attributes {stable_mosaic.version = 11 : i64} {
  func.func @_fused_kernel(%arg0: i32, %arg1: memref<2x512xbf16, #tpu.memory_space<vmem>>, %arg2: memref<512x512xbf16, #tpu.memory_space<vmem>>, %arg3: memref<1x512xf32, #tpu.memory_space<vmem>>, %arg4: memref<512x512xbf16, #tpu.memory_space<vmem>>, %arg5: memref<1x512xf32, #tpu.memory_space<vmem>>, %arg6: memref<512x256xbf16, #tpu.memory_space<vmem>>, %arg7: memref<1x256xf32, #tpu.memory_space<vmem>>, %arg8: memref<256x256xbf16, #tpu.memory_space<vmem>>, %arg9: memref<1x256xf32, #tpu.memory_space<vmem>>, %arg10: memref<256x128xbf16, #tpu.memory_space<vmem>>, %arg11: memref<1x128xf32, #tpu.memory_space<vmem>>, %arg12: memref<2x128xf32, #tpu.memory_space<vmem>>, %arg13: memref<2x512xf32, #tpu.memory_space<vmem>>) attributes {dimension_semantics = [#tpu.dimension_semantics<arbitrary>], iteration_bounds = array<i64: 2>, scalar_prefetch = 0 : i64, scratch_operands = 1 : i64, tpu.core_type = #tpu.core_type<tc>, window_params = [{transform_indices = @transform_0, window_bounds = array<i64: 2, 512>}, {transform_indices = @transform_1, window_bounds = array<i64: 512, 512>}, {pipeline_mode = #tpu.pipeline_mode<synchronous>, transform_indices = @transform_2, window_bounds = array<i64: 1, 512>}, {pipeline_mode = #tpu.pipeline_mode<synchronous>, transform_indices = @transform_3, window_bounds = array<i64: 512, 512>}, {pipeline_mode = #tpu.pipeline_mode<synchronous>, transform_indices = @transform_4, window_bounds = array<i64: 1, 512>}, {pipeline_mode = #tpu.pipeline_mode<synchronous>, transform_indices = @transform_5, window_bounds = array<i64: 512, 256>}, {pipeline_mode = #tpu.pipeline_mode<synchronous>, transform_indices = @transform_6, window_bounds = array<i64: 1, 256>}, {pipeline_mode = #tpu.pipeline_mode<synchronous>, transform_indices = @transform_7, window_bounds = array<i64: 256, 256>}, {pipeline_mode = #tpu.pipeline_mode<synchronous>, transform_indices = @transform_8, window_bounds = array<i64: 1, 256>}, {pipeline_mode = #tpu.pipeline_mode<synchronous>, transform_indices = @transform_9, window_bounds = array<i64: 256, 128>}, {pipeline_mode = #tpu.pipeline_mode<synchronous>, transform_indices = @transform_10, window_bounds = array<i64: 1, 128>}, {pipeline_mode = #tpu.pipeline_mode<synchronous>, transform_indices = @transform_11, window_bounds = array<i64: 2, 128>}]} {
    %c0_i32 = arith.constant 0 : i32
    %0 = arith.cmpi eq, %arg0, %c0_i32 : i32
    %1 = arith.extui %0 : i1 to i32
    %c0_i32_0 = arith.constant 0 : i32
    %2 = arith.cmpi ne, %1, %c0_i32_0 : i32
    scf.if %2 {
      %cst_9 = arith.constant 0.000000e+00 : f32
      %12 = vector.broadcast %cst_9 : f32 to vector<2x512xf32>
      %c0_10 = arith.constant 0 : index
      %c0_11 = arith.constant 0 : index
      %13 = vector.load %arg13[%c0_10, %c0_11] : memref<2x512xf32, #tpu.memory_space<vmem>>, vector<2x512xf32>
      tpu.vector_store %arg13[%c0_10, %c0_11], %12 {strides = array<i32>} : memref<2x512xf32, #tpu.memory_space<vmem>>, vector<2x512xf32>,
    } else {
    }
    %c0 = arith.constant 0 : index
    %c0_1 = arith.constant 0 : index
    %3 = vector.load %arg13[%c0, %c0_1] : memref<2x512xf32, #tpu.memory_space<vmem>>, vector<2x512xf32>
    %c0_2 = arith.constant 0 : index
    %c0_3 = arith.constant 0 : index
    %4 = vector.load %arg1[%c0_2, %c0_3] : memref<2x512xbf16, #tpu.memory_space<vmem>>, vector<2x512xbf16>
    %c0_4 = arith.constant 0 : index
    %c0_5 = arith.constant 0 : index
    %5 = vector.load %arg2[%c0_4, %c0_5] : memref<512x512xbf16, #tpu.memory_space<vmem>>, vector<512x512xbf16>
    %cst = arith.constant dense<0.000000e+00> : vector<2x512xf32>
    %6 = tpu.matmul %4, %5, %cst {dimension_numbers = #tpu.dot_dimension_numbers<[1], [0], [0], [1], [0, 0, 1, 1], [], []>} : vector<2x512xbf16>, vector<512x512xbf16>, vector<2x512xf32> -> vector<2x512xf32>
    %7 = arith.addf %3, %6 : vector<2x512xf32>
    %c0_6 = arith.constant 0 : index
    %c0_7 = arith.constant 0 : index
    %8 = vector.load %arg13[%c0_6, %c0_7] : memref<2x512xf32, #tpu.memory_space<vmem>>, vector<2x512xf32>
    tpu.vector_store %arg13[%c0_6, %c0_7], %7 {strides = array<i32>} : memref<2x512xf32, #tpu.memory_space<vmem>>, vector<2x512xf32>,
    %c1_i32 = arith.constant 1 : i32
    %9 = arith.cmpi eq, %arg0, %c1_i32 : i32
    %10 = arith.extui %9 : i1 to i32
    %c0_i32_8 = arith.constant 0 : i32
    %11 = arith.cmpi ne, %10, %c0_i32_8 : i32
    scf.if %11 {
      %c0_9 = arith.constant 0 : index
      %c0_10 = arith.constant 0 : index
      %12 = vector.load %arg13[%c0_9, %c0_10] : memref<2x512xf32, #tpu.memory_space<vmem>>, vector<2x512xf32>
      %c0_11 = arith.constant 0 : index
      %c0_12 = arith.constant 0 : index
      %13 = vector.load %arg3[%c0_11, %c0_12] : memref<1x512xf32, #tpu.memory_space<vmem>>, vector<1x512xf32>
      %14 = vector.broadcast %13 : vector<1x512xf32> to vector<2x512xf32>
      %15 = arith.addf %12, %14 : vector<2x512xf32>
      %16 = arith.truncf %15 : vector<2x512xf32> to vector<2x512xbf16>
      %c0_13 = arith.constant 0 : index
      %c0_14 = arith.constant 0 : index
      %17 = vector.load %arg4[%c0_13, %c0_14] : memref<512x512xbf16, #tpu.memory_space<vmem>>, vector<512x512xbf16>
      %cst_15 = arith.constant dense<0.000000e+00> : vector<2x512xf32>
      %18 = tpu.matmul %16, %17, %cst_15 {dimension_numbers = #tpu.dot_dimension_numbers<[1], [0], [0], [1], [0, 0, 1, 1], [], []>} : vector<2x512xbf16>, vector<512x512xbf16>, vector<2x512xf32> -> vector<2x512xf32>
      %c0_16 = arith.constant 0 : index
      %c0_17 = arith.constant 0 : index
      %19 = vector.load %arg5[%c0_16, %c0_17] : memref<1x512xf32, #tpu.memory_space<vmem>>, vector<1x512xf32>
      %20 = vector.broadcast %19 : vector<1x512xf32> to vector<2x512xf32>
      %21 = arith.addf %18, %20 : vector<2x512xf32>
      %cst_18 = arith.constant 0.000000e+00 : f32
      %22 = vector.broadcast %cst_18 : f32 to vector<2x512xf32>
      %23 = arith.maximumf %21, %22 : vector<2x512xf32>
      %24 = arith.truncf %23 : vector<2x512xf32> to vector<2x512xbf16>
      %c0_19 = arith.constant 0 : index
      %c0_20 = arith.constant 0 : index
      %25 = vector.load %arg6[%c0_19, %c0_20] : memref<512x256xbf16, #tpu.memory_space<vmem>>, vector<512x256xbf16>
      %cst_21 = arith.constant dense<0.000000e+00> : vector<2x256xf32>
      %26 = tpu.matmul %24, %25, %cst_21 {dimension_numbers = #tpu.dot_dimension_numbers<[1], [0], [0], [1], [0, 0, 1, 1], [], []>} : vector<2x512xbf16>, vector<512x256xbf16>, vector<2x256xf32> -> vector<2x256xf32>
      %c0_22 = arith.constant 0 : index
      %c0_23 = arith.constant 0 : index
      %27 = vector.load %arg7[%c0_22, %c0_23] : memref<1x256xf32, #tpu.memory_space<vmem>>, vector<1x256xf32>
      %28 = vector.broadcast %27 : vector<1x256xf32> to vector<2x256xf32>
      %29 = arith.addf %26, %28 : vector<2x256xf32>
      %cst_24 = arith.constant 0.000000e+00 : f32
      %30 = vector.broadcast %cst_24 : f32 to vector<2x256xf32>
      %31 = arith.maximumf %29, %30 : vector<2x256xf32>
      %32 = arith.truncf %31 : vector<2x256xf32> to vector<2x256xbf16>
      %c0_25 = arith.constant 0 : index
      %c0_26 = arith.constant 0 : index
      %33 = vector.load %arg8[%c0_25, %c0_26] : memref<256x256xbf16, #tpu.memory_space<vmem>>, vector<256x256xbf16>
      %cst_27 = arith.constant dense<0.000000e+00> : vector<2x256xf32>
      %34 = tpu.matmul %32, %33, %cst_27 {dimension_numbers = #tpu.dot_dimension_numbers<[1], [0], [0], [1], [0, 0, 1, 1], [], []>} : vector<2x256xbf16>, vector<256x256xbf16>, vector<2x256xf32> -> vector<2x256xf32>
      %c0_28 = arith.constant 0 : index
      %c0_29 = arith.constant 0 : index
      %35 = vector.load %arg9[%c0_28, %c0_29] : memref<1x256xf32, #tpu.memory_space<vmem>>, vector<1x256xf32>
      %36 = vector.broadcast %35 : vector<1x256xf32> to vector<2x256xf32>
      %37 = arith.addf %34, %36 : vector<2x256xf32>
      %38 = arith.truncf %37 : vector<2x256xf32> to vector<2x256xbf16>
      %c0_30 = arith.constant 0 : index
      %c0_31 = arith.constant 0 : index
      %39 = vector.load %arg10[%c0_30, %c0_31] : memref<256x128xbf16, #tpu.memory_space<vmem>>, vector<256x128xbf16>
      %cst_32 = arith.constant dense<0.000000e+00> : vector<2x128xf32>
      %40 = tpu.matmul %38, %39, %cst_32 {dimension_numbers = #tpu.dot_dimension_numbers<[1], [0], [0], [1], [0, 0, 1, 1], [], []>} : vector<2x256xbf16>, vector<256x128xbf16>, vector<2x128xf32> -> vector<2x128xf32>
      %c0_33 = arith.constant 0 : index
      %c0_34 = arith.constant 0 : index
      %41 = vector.load %arg11[%c0_33, %c0_34] : memref<1x128xf32, #tpu.memory_space<vmem>>, vector<1x128xf32>
      %42 = vector.broadcast %41 : vector<1x128xf32> to vector<2x128xf32>
      %43 = arith.addf %40, %42 : vector<2x128xf32>
      %c0_35 = arith.constant 0 : index
      %c0_36 = arith.constant 0 : index
      %44 = vector.load %arg12[%c0_35, %c0_36] : memref<2x128xf32, #tpu.memory_space<vmem>>, vector<2x128xf32>
      tpu.vector_store %arg12[%c0_35, %c0_36], %43 {strides = array<i32>} : memref<2x128xf32, #tpu.memory_space<vmem>>, vector<2x128xf32>,
    } else {
    }
    return
  }
  func.func @transform_0(%arg0: i32) -> (i32, i32) {
    %c0_i32 = arith.constant 0 : i32
    %c0_i32_0 = arith.constant 0 : i32
    return %c0_i32, %arg0 : i32, i32
  }
  func.func @transform_1(%arg0: i32) -> (i32, i32) {
    %c0_i32 = arith.constant 0 : i32
    %c0_i32_0 = arith.constant 0 : i32
    return %arg0, %c0_i32 : i32, i32
  }
  func.func @transform_2(%arg0: i32) -> (i32, i32) {
    %c0_i32 = arith.constant 0 : i32
    %c0_i32_0 = arith.constant 0 : i32
    %c0_i32_1 = arith.constant 0 : i32
    return %c0_i32, %c0_i32_0 : i32, i32
  }
  func.func @transform_3(%arg0: i32) -> (i32, i32) {
    %c0_i32 = arith.constant 0 : i32
    %c0_i32_0 = arith.constant 0 : i32
    %c0_i32_1 = arith.constant 0 : i32
    return %c0_i32, %c0_i32_0 : i32, i32
  }
  func.func @transform_4(%arg0: i32) -> (i32, i32) {
    %c0_i32 = arith.constant 0 : i32
    %c0_i32_0 = arith.constant 0 : i32
    %c0_i32_1 = arith.constant 0 : i32
    return %c0_i32, %c0_i32_0 : i32, i32
  }
  func.func @transform_5(%arg0: i32) -> (i32, i32) {
    %c0_i32 = arith.constant 0 : i32
    %c0_i32_0 = arith.constant 0 : i32
    %c0_i32_1 = arith.constant 0 : i32
    return %c0_i32, %c0_i32_0 : i32, i32
  }
  func.func @transform_6(%arg0: i32) -> (i32, i32) {
    %c0_i32 = arith.constant 0 : i32
    %c0_i32_0 = arith.constant 0 : i32
    %c0_i32_1 = arith.constant 0 : i32
    return %c0_i32, %c0_i32_0 : i32, i32
  }
  func.func @transform_7(%arg0: i32) -> (i32, i32) {
    %c0_i32 = arith.constant 0 : i32
    %c0_i32_0 = arith.constant 0 : i32
    %c0_i32_1 = arith.constant 0 : i32
    return %c0_i32, %c0_i32_0 : i32, i32
  }
  func.func @transform_8(%arg0: i32) -> (i32, i32) {
    %c0_i32 = arith.constant 0 : i32
    %c0_i32_0 = arith.constant 0 : i32
    %c0_i32_1 = arith.constant 0 : i32
    return %c0_i32, %c0_i32_0 : i32, i32
  }
  func.func @transform_9(%arg0: i32) -> (i32, i32) {
    %c0_i32 = arith.constant 0 : i32
    %c0_i32_0 = arith.constant 0 : i32
    %c0_i32_1 = arith.constant 0 : i32
    return %c0_i32, %c0_i32_0 : i32, i32
  }
  func.func @transform_10(%arg0: i32) -> (i32, i32) {
    %c0_i32 = arith.constant 0 : i32
    %c0_i32_0 = arith.constant 0 : i32
    %c0_i32_1 = arith.constant 0 : i32
    return %c0_i32, %c0_i32_0 : i32, i32
  }
  func.func @transform_11(%arg0: i32) -> (i32, i32) {
    %c0_i32 = arith.constant 0 : i32
    %c0_i32_0 = arith.constant 0 : i32
    %c0_i32_1 = arith.constant 0 : i32
    return %c0_i32, %c0_i32_0 : i32, i32
  }
}

</mosaic_0001>

<llo_original>
// kernel: mt_classifier_3d_forward.1
$region0: #{mt_classifier_3d_forward.1}
  #allocation0 [shape = 'u32[]', space=smem, size = 0x4, offset = 0x4, fixed_abs, tag = 'smem constant byte address 0x4 - core index']
  #allocation1 [shape = 'u32[144,128]{1,0:T(1,128)}', space=vmem, size = 0x12000, scoped, tag = 'internal scratch']
  #allocation2 [shape = 'f32[2,512]{1,0:T(2,128)}', space=vmem, size = 0x1000, scoped, tag = 'scratch operand']
  %s0 = inlined_call_operand.vmem [shape: bf16[2,1024], index: 0, kind: input, shape index: {}]
  %s1 = inlined_call_operand.hbm [shape: bf16[1024,512], index: 1, kind: input, shape index: {}]
  %s2 = inlined_call_operand.vmem [shape: f32[1,512], index: 2, kind: input, shape index: {}]
  %s3 = inlined_call_operand.hbm [shape: bf16[512,512], index: 3, kind: input, shape index: {}]
  %s4 = inlined_call_operand.vmem [shape: f32[1,512], index: 4, kind: input, shape index: {}]
  %s5 = inlined_call_operand.hbm [shape: bf16[512,256], index: 5, kind: input, shape index: {}]
  %s6 = inlined_call_operand.vmem [shape: f32[1,256], index: 6, kind: input, shape index: {}]
  %s7 = inlined_call_operand.vmem [shape: bf16[256,256], index: 7, kind: input, shape index: {}]
  %s8 = inlined_call_operand.vmem [shape: f32[1,256], index: 8, kind: input, shape index: {}]
  %s9 = inlined_call_operand.hbm [shape: bf16[256,128], index: 9, kind: input, shape index: {}]
  %s10 = inlined_call_operand.vmem [shape: f32[1,128], index: 10, kind: input, shape index: {}]
  %s11 = inlined_call_operand.vmem [shape: f32[2,128], index: 11, kind: output, shape index: {}]
  %s12 = sld [smem:[#allocation0]]
  $region101: #{mt_classifier_3d_forward.1} parent=0
    _
  %s14 = ssub.s32 1, %s12
  %s15 = scalar_select 0, %s14, %s12
  $region1: #{mt_classifier_3d_forward.1} parent=0
    #allocation3 [shape = 'u8[1048576]{0}', space=vmem, size = 0x100000, scoped, tag = 'input window, operand 1']
    #allocation4 [shape = 's32[2]{0}', space=sflag, size = 0x8, scoped, tag = 'scoped memory for mt_classifier_3d_forward.1']
    #allocation5 [shape = 'u8[524288]{0}', space=vmem, size = 0x80000, scoped, tag = 'input window, operand 3, single buffered']
    #allocation6 [shape = 's32[1]{0}', space=sflag, size = 0x4, scoped, tag = 'scoped memory for mt_classifier_3d_forward.1']
    #allocation7 [shape = 'u8[262144]{0}', space=vmem, size = 0x40000, scoped, tag = 'input window, operand 5, single buffered']
    #allocation8 [shape = 'u8[65536]{0}', space=vmem, size = 0x10000, scoped, tag = 'input window, operand 9, single buffered']
    #allocation9 [shape = 's32[1]{0}', space=sflag, size = 0x4, scoped, tag = 'scoped memory for mt_classifier_3d_forward.1']
    %16 = vsyncpa [#allocation4], 0
    %s17 = scalar_lea.sflag [#allocation4], 1
    %18 = vsyncpa %s17, 0
    %19 = vsyncpa [#allocation6], 0
    %20 = vsyncpa [#allocation9], 0
    loop: start=0, step=1, limit=4
    $region2: #{mt_classifier_3d_forward.1} parent=1 // loop_pre_header
      _
    $region3: #{mt_classifier_3d_forward.1} parent=1 // loop_header
      %s22 = sphi 0, %s26
      %p23 = scmp.ge.s32.totalorder %s22, 4
      %s32 = sphi 0, %s34
      %s35 = sphi 0, %s32
      %s36 = sphi 0, %s35
      %s52 = sphi 0, %s36
      %s58 = sphi 0, %s60
      %s61 = sphi 0, %s58
      %s62 = sphi 0, %s61
      %s78 = sphi 0, %s62
      %s82 = sphi 0, %s82
      %s84 = sphi 0, %s82
      %s85 = sphi 0, %s84
      %s99 = sphi 0, %s85
      %s103 = sphi 0, %s103
      %s105 = sphi 0, %s103
      %s106 = sphi 0, %s105
      %s120 = sphi 0, %s106
      %s124 = sphi 0, %s124
      %s126 = sphi 0, %s124
      %s127 = sphi 0, %s126
      %s141 = sphi 0, %s127
      %s145 = sphi 0, %s145
      %s147 = sphi 0, %s145
      %s148 = sphi 0, %s147
      %s162 = sphi 0, %s148
      %s166 = sphi 0, %s166
      %s168 = sphi 0, %s166
      %s169 = sphi 0, %s168
      %s183 = sphi 0, %s169
      %s187 = sphi 0, %s187
      %s189 = sphi 0, %s187
      %s190 = sphi 0, %s189
      %s204 = sphi 0, %s190
      %s208 = sphi 0, %s208
      %s210 = sphi 0, %s208
      %s211 = sphi 0, %s210
      %s225 = sphi 0, %s211
      %s229 = sphi 0, %s229
      %s231 = sphi 0, %s229
      %s232 = sphi 0, %s231
      %s246 = sphi 0, %s232
      %s250 = sphi 0, %s250
      %s252 = sphi 0, %s250
      %s253 = sphi 0, %s252
      %s267 = sphi 0, %s253
      %s271 = sphi 0, %s271
      %s273 = sphi 0, %s271
      %s274 = sphi 0, %s273
      %s288 = sphi 0, %s274
    $region4: #{mt_classifier_3d_forward.1} parent=1 // loop_header_branch
      %25 = sbr.rel (%p23) target = $region8
    $region5: #{mt_classifier_3d_forward.1} parent=1 // loop_body
      %s27 = ssub.s32 %s22, 1
      %s28 = ssub.s32 %s22, 2
      %s29 = sadd.s32 %s22, 1
      %s30 = ssub.s32 %s22, %s29
      %p31 = scmp.eq.s32.totalorder %s30, 0
      %s33 = sadd.s32 %s32, 1
      %s34 = scalar_select %p31, %s32, %s33
      %p37 = pneg %p31
      %p38 = scmp.eq.s32.totalorder %s22, 1
      %p39 = por %p37, %p38
      %p40 = scmp.ne.s32.totalorder %s32, %s35
      %p41 = scmp.eq.s32.totalorder %s22, 0
      %p42 = por %p40, %p41
      %p43 = scmp.ne.s32.totalorder %s32, %s35
      %p44 = scmp.eq.s32.totalorder %s27, 1
      %p45 = por %p43, %p44
      %p46 = scmp.ne.s32.totalorder %s35, %s36
      %p47 = scmp.eq.s32.totalorder %s27, 0
      %p48 = por %p46, %p47
      %p49 = scmp.ne.s32.totalorder %s35, %s36
      %p50 = scmp.eq.s32.totalorder %s28, 1
      %p51 = por %p49, %p50
      %p53 = scmp.ne.s32.totalorder %s36, %s52
      %p54 = scmp.eq.s32.totalorder %s28, 0
      %p55 = por %p53, %p54
      %s56 = ssub.s32 %s22, %s29
      %p57 = scmp.eq.s32.totalorder %s56, 0
      %s59 = sadd.s32 %s58, 1
      %s60 = scalar_select %p57, %s58, %s59
      %p63 = pneg %p57
      %p64 = scmp.eq.s32.totalorder %s22, 1
      %p65 = por %p63, %p64
      %p66 = scmp.ne.s32.totalorder %s58, %s61
      %p67 = scmp.eq.s32.totalorder %s22, 0
      %p68 = por %p66, %p67
      %p69 = scmp.ne.s32.totalorder %s58, %s61
      %p70 = scmp.eq.s32.totalorder %s27, 1
      %p71 = por %p69, %p70
      %p72 = scmp.ne.s32.totalorder %s61, %s62
      %p73 = scmp.eq.s32.totalorder %s27, 0
      %p74 = por %p72, %p73
      %p75 = scmp.ne.s32.totalorder %s61, %s62
      %p76 = scmp.eq.s32.totalorder %s28, 1
      %p77 = por %p75, %p76
      %p79 = scmp.ne.s32.totalorder %s62, %s78
      %p80 = scmp.eq.s32.totalorder %s28, 0
      %p81 = por %p79, %p80
      %s83 = sadd.s32 %s82, 1
      %p86 = scmp.eq.s32.totalorder %s22, 1
      %p87 = scmp.ne.s32.totalorder %s82, %s84
      %p88 = scmp.eq.s32.totalorder %s22, 0
      %p89 = por %p87, %p88
      %p90 = scmp.ne.s32.totalorder %s82, %s84
      %p91 = scmp.eq.s32.totalorder %s27, 1
      %p92 = por %p90, %p91
      %p93 = scmp.ne.s32.totalorder %s84, %s85
      %p94 = scmp.eq.s32.totalorder %s27, 0
      %p95 = por %p93, %p94
      %p96 = scmp.ne.s32.totalorder %s84, %s85
      %p97 = scmp.eq.s32.totalorder %s28, 1
      %p98 = por %p96, %p97
      %p100 = scmp.ne.s32.totalorder %s85, %s99
      %p101 = scmp.eq.s32.totalorder %s28, 0
      %p102 = por %p100, %p101
      %s104 = sadd.s32 %s103, 1
      %p107 = scmp.eq.s32.totalorder %s22, 1
      %p108 = scmp.ne.s32.totalorder %s103, %s105
      %p109 = scmp.eq.s32.totalorder %s22, 0
      %p110 = por %p108, %p109
      %p111 = scmp.ne.s32.totalorder %s103, %s105
      %p112 = scmp.eq.s32.totalorder %s27, 1
      %p113 = por %p111, %p112
      %p114 = scmp.ne.s32.totalorder %s105, %s106
      %p115 = scmp.eq.s32.totalorder %s27, 0
      %p116 = por %p114, %p115
      %p117 = scmp.ne.s32.totalorder %s105, %s106
      %p118 = scmp.eq.s32.totalorder %s28, 1
      %p119 = por %p117, %p118
      %p121 = scmp.ne.s32.totalorder %s106, %s120
      %p122 = scmp.eq.s32.totalorder %s28, 0
      %p123 = por %p121, %p122
      %s125 = sadd.s32 %s124, 1
      %p128 = scmp.eq.s32.totalorder %s22, 1
      %p129 = scmp.ne.s32.totalorder %s124, %s126
      %p130 = scmp.eq.s32.totalorder %s22, 0
      %p131 = por %p129, %p130
      %p132 = scmp.ne.s32.totalorder %s124, %s126
      %p133 = scmp.eq.s32.totalorder %s27, 1
      %p134 = por %p132, %p133
      %p135 = scmp.ne.s32.totalorder %s126, %s127
      %p136 = scmp.eq.s32.totalorder %s27, 0
      %p137 = por %p135, %p136
      %p138 = scmp.ne.s32.totalorder %s126, %s127
      %p139 = scmp.eq.s32.totalorder %s28, 1
      %p140 = por %p138, %p139
      %p142 = scmp.ne.s32.totalorder %s127, %s141
      %p143 = scmp.eq.s32.totalorder %s28, 0
      %p144 = por %p142, %p143
      %s146 = sadd.s32 %s145, 1
      %p149 = scmp.eq.s32.totalorder %s22, 1
      %p150 = scmp.ne.s32.totalorder %s145, %s147
      %p151 = scmp.eq.s32.totalorder %s22, 0
      %p152 = por %p150, %p151
      %p153 = scmp.ne.s32.totalorder %s145, %s147
      %p154 = scmp.eq.s32.totalorder %s27, 1
      %p155 = por %p153, %p154
      %p156 = scmp.ne.s32.totalorder %s147, %s148
      %p157 = scmp.eq.s32.totalorder %s27, 0
      %p158 = por %p156, %p157
      %p159 = scmp.ne.s32.totalorder %s147, %s148
      %p160 = scmp.eq.s32.totalorder %s28, 1
      %p161 = por %p159, %p160
      %p163 = scmp.ne.s32.totalorder %s148, %s162
      %p164 = scmp.eq.s32.totalorder %s28, 0
      %p165 = por %p163, %p164
      %s167 = sadd.s32 %s166, 1
      %p170 = scmp.eq.s32.totalorder %s22, 1
      %p171 = scmp.ne.s32.totalorder %s166, %s168
      %p172 = scmp.eq.s32.totalorder %s22, 0
      %p173 = por %p171, %p172
      %p174 = scmp.ne.s32.totalorder %s166, %s168
      %p175 = scmp.eq.s32.totalorder %s27, 1
      %p176 = por %p174, %p175
      %p177 = scmp.ne.s32.totalorder %s168, %s169
      %p178 = scmp.eq.s32.totalorder %s27, 0
      %p179 = por %p177, %p178
      %p180 = scmp.ne.s32.totalorder %s168, %s169
      %p181 = scmp.eq.s32.totalorder %s28, 1
      %p182 = por %p180, %p181
      %p184 = scmp.ne.s32.totalorder %s169, %s183
      %p185 = scmp.eq.s32.totalorder %s28, 0
      %p186 = por %p184, %p185
      %s188 = sadd.s32 %s187, 1
      %p191 = scmp.eq.s32.totalorder %s22, 1
      %p192 = scmp.ne.s32.totalorder %s187, %s189
      %p193 = scmp.eq.s32.totalorder %s22, 0
      %p194 = por %p192, %p193
      %p195 = scmp.ne.s32.totalorder %s187, %s189
      %p196 = scmp.eq.s32.totalorder %s27, 1
      %p197 = por %p195, %p196
      %p198 = scmp.ne.s32.totalorder %s189, %s190
      %p199 = scmp.eq.s32.totalorder %s27, 0
      %p200 = por %p198, %p199
      %p201 = scmp.ne.s32.totalorder %s189, %s190
      %p202 = scmp.eq.s32.totalorder %s28, 1
      %p203 = por %p201, %p202
      %p205 = scmp.ne.s32.totalorder %s190, %s204
      %p206 = scmp.eq.s32.totalorder %s28, 0
      %p207 = por %p205, %p206
      %s209 = sadd.s32 %s208, 1
      %p212 = scmp.eq.s32.totalorder %s22, 1
      %p213 = scmp.ne.s32.totalorder %s208, %s210
      %p214 = scmp.eq.s32.totalorder %s22, 0
      %p215 = por %p213, %p214
      %p216 = scmp.ne.s32.totalorder %s208, %s210
      %p217 = scmp.eq.s32.totalorder %s27, 1
      %p218 = por %p216, %p217
      %p219 = scmp.ne.s32.totalorder %s210, %s211
      %p220 = scmp.eq.s32.totalorder %s27, 0
      %p221 = por %p219, %p220
      %p222 = scmp.ne.s32.totalorder %s210, %s211
      %p223 = scmp.eq.s32.totalorder %s28, 1
      %p224 = por %p222, %p223
      %p226 = scmp.ne.s32.totalorder %s211, %s225
      %p227 = scmp.eq.s32.totalorder %s28, 0
      %p228 = por %p226, %p227
      %s230 = sadd.s32 %s229, 1
      %p233 = scmp.eq.s32.totalorder %s22, 1
      %p234 = scmp.ne.s32.totalorder %s229, %s231
      %p235 = scmp.eq.s32.totalorder %s22, 0
      %p236 = por %p234, %p235
      %p237 = scmp.ne.s32.totalorder %s229, %s231
      %p238 = scmp.eq.s32.totalorder %s27, 1
      %p239 = por %p237, %p238
      %p240 = scmp.ne.s32.totalorder %s231, %s232
      %p241 = scmp.eq.s32.totalorder %s27, 0
      %p242 = por %p240, %p241
      %p243 = scmp.ne.s32.totalorder %s231, %s232
      %p244 = scmp.eq.s32.totalorder %s28, 1
      %p245 = por %p243, %p244
      %p247 = scmp.ne.s32.totalorder %s232, %s246
      %p248 = scmp.eq.s32.totalorder %s28, 0
      %p249 = por %p247, %p248
      %s251 = sadd.s32 %s250, 1
      %p254 = scmp.eq.s32.totalorder %s22, 1
      %p255 = scmp.ne.s32.totalorder %s250, %s252
      %p256 = scmp.eq.s32.totalorder %s22, 0
      %p257 = por %p255, %p256
      %p258 = scmp.ne.s32.totalorder %s250, %s252
      %p259 = scmp.eq.s32.totalorder %s27, 1
      %p260 = por %p258, %p259
      %p261 = scmp.ne.s32.totalorder %s252, %s253
      %p262 = scmp.eq.s32.totalorder %s27, 0
      %p263 = por %p261, %p262
      %p264 = scmp.ne.s32.totalorder %s252, %s253
      %p265 = scmp.eq.s32.totalorder %s28, 1
      %p266 = por %p264, %p265
      %p268 = scmp.ne.s32.totalorder %s253, %s267
      %p269 = scmp.eq.s32.totalorder %s28, 0
      %p270 = por %p268, %p269
      %s272 = sadd.s32 %s271, 1
      %p275 = scmp.eq.s32.totalorder %s22, 1
      %p276 = scmp.ne.s32.totalorder %s271, %s273
      %p277 = scmp.eq.s32.totalorder %s22, 0
      %p278 = por %p276, %p277
      %p279 = scmp.ne.s32.totalorder %s271, %s273
      %p280 = scmp.eq.s32.totalorder %s27, 1
      %p281 = por %p279, %p280
      %p282 = scmp.ne.s32.totalorder %s273, %s274
      %p283 = scmp.eq.s32.totalorder %s27, 0
      %p284 = por %p282, %p283
      %p285 = scmp.ne.s32.totalorder %s273, %s274
      %p286 = scmp.eq.s32.totalorder %s28, 1
      %p287 = por %p285, %p286
      %p289 = scmp.ne.s32.totalorder %s274, %s288
      %p290 = scmp.eq.s32.totalorder %s28, 0
      %p291 = por %p289, %p290
      %p292 = scmp.le.s32.totalorder 1, %s22
      %p293 = scmp.lt.s32.totalorder %s22, 3
      %p294 = pnand %p292, %p293
      %p295 = pneg %p294
      // Predicated region
      $region9: #{mt_classifier_3d_forward.1} parent=5 // pred_check
        _
      $region10: #{mt_classifier_3d_forward.1} parent=5 // pred_check_branch
        %297 = sbr.rel (%p294) target = $region12
      $region11: #{mt_classifier_3d_forward.1} parent=5 // pred_region
        %s298 = ssub.s32 %s22, 1
        // Predicated region
        $region13: #{mt_classifier_3d_forward.1} parent=11 // pred_check
          %p299 = pneg %p95
        $region14: #{mt_classifier_3d_forward.1} parent=11 // pred_check_branch
          %301 = sbr.rel (%p299) target = $region16
        $region15: #{mt_classifier_3d_forward.1} parent=11 // pred_region
          _
        $region16: #{mt_classifier_3d_forward.1} parent=11 // pred_fallthru
          _
        // Predicated region
        $region17: #{mt_classifier_3d_forward.1} parent=11 // pred_check
          %p302 = pneg %p116
        $region18: #{mt_classifier_3d_forward.1} parent=11 // pred_check_branch
          %304 = sbr.rel (%p302) target = $region20
        $region19: #{mt_classifier_3d_forward.1} parent=11 // pred_region
          %s306 = ssub.s32 16384, 16384
          %307 = vsyncadd [#allocation6], %s306
          %s308 = sshll.u32 [#allocation5], 4
          %s309 = int_to_ptr.vmem [resolvable:$true] %s308
          %314 = dma.hbm_to_vmem [thread:$0]  %s3, 16384, %s309, [#allocation6], 256, 256, 16
        $region20: #{mt_classifier_3d_forward.1} parent=11 // pred_fallthru
          _
        // Predicated region
        $region21: #{mt_classifier_3d_forward.1} parent=11 // pred_check
          %p315 = pneg %p137
        $region22: #{mt_classifier_3d_forward.1} parent=11 // pred_check_branch
          %317 = sbr.rel (%p315) target = $region24
        $region23: #{mt_classifier_3d_forward.1} parent=11 // pred_region
          _
        $region24: #{mt_classifier_3d_forward.1} parent=11 // pred_fallthru
          _
        // Predicated region
        $region25: #{mt_classifier_3d_forward.1} parent=11 // pred_check
          %p318 = pneg %p158
        $region26: #{mt_classifier_3d_forward.1} parent=11 // pred_check_branch
          %320 = sbr.rel (%p318) target = $region28
        $region27: #{mt_classifier_3d_forward.1} parent=11 // pred_region
          %s322 = ssub.s32 8192, 8192
          %323 = vsyncadd [#allocation6], %s322
          %s324 = sshll.u32 [#allocation7], 4
          %s325 = int_to_ptr.vmem [resolvable:$true] %s324
          %330 = dma.hbm_to_vmem [thread:$0]  %s5, 8192, %s325, [#allocation6], 128, 128, 8
        $region28: #{mt_classifier_3d_forward.1} parent=11 // pred_fallthru
          _
        // Predicated region
        $region29: #{mt_classifier_3d_forward.1} parent=11 // pred_check
          %p331 = pneg %p179
        $region30: #{mt_classifier_3d_forward.1} parent=11 // pred_check_branch
          %333 = sbr.rel (%p331) target = $region32
        $region31: #{mt_classifier_3d_forward.1} parent=11 // pred_region
          _
        $region32: #{mt_classifier_3d_forward.1} parent=11 // pred_fallthru
          _
        // Predicated region
        $region33: #{mt_classifier_3d_forward.1} parent=11 // pred_check
          %p334 = pneg %p200
        $region34: #{mt_classifier_3d_forward.1} parent=11 // pred_check_branch
          %336 = sbr.rel (%p334) target = $region36
        $region35: #{mt_classifier_3d_forward.1} parent=11 // pred_region
          _
        $region36: #{mt_classifier_3d_forward.1} parent=11 // pred_fallthru
          _
        // Predicated region
        $region37: #{mt_classifier_3d_forward.1} parent=11 // pred_check
          %p337 = pneg %p221
        $region38: #{mt_classifier_3d_forward.1} parent=11 // pred_check_branch
          %339 = sbr.rel (%p337) target = $region40
        $region39: #{mt_classifier_3d_forward.1} parent=11 // pred_region
          _
        $region40: #{mt_classifier_3d_forward.1} parent=11 // pred_fallthru
          _
        // Predicated region
        $region41: #{mt_classifier_3d_forward.1} parent=11 // pred_check
          %p340 = pneg %p242
        $region42: #{mt_classifier_3d_forward.1} parent=11 // pred_check_branch
          %342 = sbr.rel (%p340) target = $region44
        $region43: #{mt_classifier_3d_forward.1} parent=11 // pred_region
          %s344 = ssub.s32 2048, 2048
          %345 = vsyncadd [#allocation9], %s344
          %s346 = sshll.u32 [#allocation8], 4
          %s347 = int_to_ptr.vmem [resolvable:$true] %s346
          %352 = dma.hbm_to_vmem [thread:$0]  %s9, 2048, %s347, [#allocation9], 64, 64, 4
        $region44: #{mt_classifier_3d_forward.1} parent=11 // pred_fallthru
          _
        // Predicated region
        $region45: #{mt_classifier_3d_forward.1} parent=11 // pred_check
          %p353 = pneg %p263
        $region46: #{mt_classifier_3d_forward.1} parent=11 // pred_check_branch
          %355 = sbr.rel (%p353) target = $region48
        $region47: #{mt_classifier_3d_forward.1} parent=11 // pred_region
          _
        $region48: #{mt_classifier_3d_forward.1} parent=11 // pred_fallthru
          _
      $region12: #{mt_classifier_3d_forward.1} parent=5 // pred_fallthru
        _
      %p356 = scmp.lt.s32.totalorder %s22, 2
      // Predicated region
      $region49: #{mt_classifier_3d_forward.1} parent=5 // pred_check
        %p357 = pneg %p356
      $region50: #{mt_classifier_3d_forward.1} parent=5 // pred_check_branch
        %359 = sbr.rel (%p357) target = $region52
      $region51: #{mt_classifier_3d_forward.1} parent=5 // pred_region
        // Predicated region
        $region53: #{mt_classifier_3d_forward.1} parent=51 // pred_check
          %p360 = pneg %p42
        $region54: #{mt_classifier_3d_forward.1} parent=51 // pred_check_branch
          %362 = sbr.rel (%p360) target = $region56
        $region55: #{mt_classifier_3d_forward.1} parent=51 // pred_region
          %s363 = smul.u32 4, %s22
          %p364 = scmp.lt.s32.totalorder %s363, 7
          %s365 = scalar_select %p364, %s363, 7
          %s366 = scalar_lea.vmem %s0, %s365
          %s367 = smul.u32 4, %s22
        $region56: #{mt_classifier_3d_forward.1} parent=51 // pred_fallthru
          _
        // Predicated region
        $region57: #{mt_classifier_3d_forward.1} parent=51 // pred_check
          %p368 = pneg %p68
        $region58: #{mt_classifier_3d_forward.1} parent=51 // pred_check_branch
          %370 = sbr.rel (%p368) target = $region60
        $region59: #{mt_classifier_3d_forward.1} parent=51 // pred_region
          %s371 = sand.u32 %s58, 1
          %s372 = scalar_lea.sflag [#allocation4], %s371
          %s373 = sand.u32 %s58, 1
          %s374 = smul.addr %s373, 1024
          %s375 = scalar_lea.vmem [#allocation3], %s374
          %s376 = smul.u32 64, %s22
          %s378 = ssub.s32 16384, 16384
          %379 = vsyncadd %s372, %s378
          %s380 = smul.addr %s376, 4
          %s381 = smul.addr %s380, 64
          %s382 = scalar_lea.hbm %s1, %s381
          %s383 = sshll.u32 %s375, 4
          %s384 = int_to_ptr.vmem [resolvable:$true] %s383
          %389 = dma.hbm_to_vmem [thread:$0]  %s382, 16384, %s384, %s372, 256, 256, 16
        $region60: #{mt_classifier_3d_forward.1} parent=51 // pred_fallthru
          _
      $region52: #{mt_classifier_3d_forward.1} parent=5 // pred_fallthru
        _
      %p390 = scmp.le.s32.totalorder 1, %s22
      %p391 = scmp.lt.s32.totalorder %s22, 3
      %p392 = pnand %p390, %p391
      %p393 = pneg %p392
      // Predicated region
      $region61: #{mt_classifier_3d_forward.1} parent=5 // pred_check
        _
      $region62: #{mt_classifier_3d_forward.1} parent=5 // pred_check_branch
        %395 = sbr.rel (%p392) target = $region64
      $region63: #{mt_classifier_3d_forward.1} parent=5 // pred_region
        %s396 = ssub.s32 %s22, 1
        %s397 = sand.u32 %s61, 1
        %s398 = scalar_lea.sflag [#allocation4], %s397
        %s399 = sand.u32 %s61, 1
        %s400 = smul.addr %s399, 1024
        %s401 = scalar_lea.vmem [#allocation3], %s400
        // Predicated region
        $region65: #{mt_classifier_3d_forward.1} parent=63 // pred_check
          %p402 = pneg %p74
        $region66: #{mt_classifier_3d_forward.1} parent=63 // pred_check_branch
          %404 = sbr.rel (%p402) target = $region68
        $region67: #{mt_classifier_3d_forward.1} parent=63 // pred_region
          %405 = dma.done %s398, 16384
        $region68: #{mt_classifier_3d_forward.1} parent=63 // pred_fallthru
          _
        // Predicated region
        $region69: #{mt_classifier_3d_forward.1} parent=63 // pred_check
          %p406 = pneg %p116
        $region70: #{mt_classifier_3d_forward.1} parent=63 // pred_check_branch
          %408 = sbr.rel (%p406) target = $region72
        $region71: #{mt_classifier_3d_forward.1} parent=63 // pred_region
          %409 = dma.done [#allocation6], 16384
        $region72: #{mt_classifier_3d_forward.1} parent=63 // pred_fallthru
          _
        // Predicated region
        $region73: #{mt_classifier_3d_forward.1} parent=63 // pred_check
          %p410 = pneg %p158
        $region74: #{mt_classifier_3d_forward.1} parent=63 // pred_check_branch
          %412 = sbr.rel (%p410) target = $region76
        $region75: #{mt_classifier_3d_forward.1} parent=63 // pred_region
          %413 = dma.done [#allocation6], 8192
        $region76: #{mt_classifier_3d_forward.1} parent=63 // pred_fallthru
          _
        // Predicated region
        $region77: #{mt_classifier_3d_forward.1} parent=63 // pred_check
          %p414 = pneg %p242
        $region78: #{mt_classifier_3d_forward.1} parent=63 // pred_check_branch
          %416 = sbr.rel (%p414) target = $region80
        $region79: #{mt_classifier_3d_forward.1} parent=63 // pred_region
          %417 = dma.done [#allocation9], 2048
        $region80: #{mt_classifier_3d_forward.1} parent=63 // pred_fallthru
          _
        %s418 = smul.u32 4, %s27
        %p419 = scmp.lt.s32.totalorder %s418, 7
        %s420 = scalar_select %p419, %s418, 7
        %s421 = scalar_lea.vmem %s0, %s420
        %p422 = pneg %p48
        %p423 = pneg %p45
        %s424 = sand.u32 %s61, 1
        %s425 = scalar_lea.sflag [#allocation4], %s424
        %s426 = sand.u32 %s61, 1
        %s427 = smul.addr %s426, 1024
        %s428 = scalar_lea.vmem [#allocation3], %s427
        %p429 = pneg %p74
        %p430 = pneg %p71
        %p431 = pneg %p95
        %p432 = pneg %p92
        %p433 = pneg %p116
        %p434 = pneg %p113
        %p435 = pneg %p137
        %p436 = pneg %p134
        %p437 = pneg %p158
        %p438 = pneg %p155
        %p439 = pneg %p179
        %p440 = pneg %p176
        %p441 = pneg %p200
        %p442 = pneg %p197
        %p443 = pneg %p221
        %p444 = pneg %p218
        %p445 = pneg %p242
        %p446 = pneg %p239
        %p447 = pneg %p263
        %p448 = pneg %p260
        %p449 = pneg %p284
        %p450 = pneg %p281
        %s451 = smul.u32 4, %s27
        %p452 = scmp.lt.s32.totalorder %s451, 7
        %s453 = scalar_select %p452, %s451, 7
        %s454 = scalar_lea.vmem %s0, %s453
        %s455 = smul.u32 4, %s27
        %s456 = smul.u32 64, %s27
        %p458 = scmp.eq.s32.totalorder %s27, 0
        // Predicated region
        $region81: #{mt_classifier_3d_forward.1} parent=63 // pred_check
          %p459 = pneg %p458
        $region82: #{mt_classifier_3d_forward.1} parent=63 // pred_check_branch
          %461 = sbr.rel (%p459) target = $region84
        $region83: #{mt_classifier_3d_forward.1} parent=63 // pred_region
          %462 = vst [vmem:[#allocation2] sm:$0xff] 0.0
        $region84: #{mt_classifier_3d_forward.1} parent=63 // pred_fallthru
          _
        %v463 = vld [vmem:[#allocation2] sm:$0xff]
        %v464 = vld [vmem:[%s454] sm:$0xf]
        %v465 = vld [vmem:[%s401] sm:$0xff]
        %v466 = vld [vmem:[%s401 + $0x8] sm:$0xff]
        %v467 = vld [vmem:[%s401 + $0x10] sm:$0xff]
        %v468 = vld [vmem:[%s401 + $0x18] sm:$0xff]
        %v469 = vld [vmem:[%s401 + $0x20] sm:$0xff]
        %v470 = vld [vmem:[%s401 + $0x28] sm:$0xff]
        %v471 = vld [vmem:[%s401 + $0x30] sm:$0xff]
        %v472 = vld [vmem:[%s401 + $0x38] sm:$0xff]
        %v473 = vld [vmem:[%s401 + $0x40] sm:$0xff]
        %v474 = vld [vmem:[%s401 + $0x48] sm:$0xff]
        %v475 = vld [vmem:[%s401 + $0x50] sm:$0xff]
        %v476 = vld [vmem:[%s401 + $0x58] sm:$0xff]
        %v477 = vld [vmem:[%s401 + $0x60] sm:$0xff]
        %v478 = vld [vmem:[%s401 + $0x68] sm:$0xff]
        %v479 = vld [vmem:[%s401 + $0x70] sm:$0xff]
        %v480 = vld [vmem:[%s401 + $0x78] sm:$0xff]
        %v481 = vld [vmem:[%s401 + $0x80] sm:$0xff]
        %v482 = vld [vmem:[%s401 + $0x88] sm:$0xff]
        %v483 = vld [vmem:[%s401 + $0x90] sm:$0xff]
        %v484 = vld [vmem:[%s401 + $0x98] sm:$0xff]
        %v485 = vld [vmem:[%s401 + $0xa0] sm:$0xff]
        %v486 = vld [vmem:[%s401 + $0xa8] sm:$0xff]
        %v487 = vld [vmem:[%s401 + $0xb0] sm:$0xff]
        %v488 = vld [vmem:[%s401 + $0xb8] sm:$0xff]
        %v489 = vld [vmem:[%s401 + $0xc0] sm:$0xff]
        %v490 = vld [vmem:[%s401 + $0xc8] sm:$0xff]
        %v491 = vld [vmem:[%s401 + $0xd0] sm:$0xff]
        %v492 = vld [vmem:[%s401 + $0xd8] sm:$0xff]
        %v493 = vld [vmem:[%s401 + $0xe0] sm:$0xff]
        %v494 = vld [vmem:[%s401 + $0xe8] sm:$0xff]
        %v495 = vld [vmem:[%s401 + $0xf0] sm:$0xff]
        %v496 = vld [vmem:[%s401 + $0xf8] sm:$0xff]
        %v497 = vld [vmem:[%s401 + $0x100] sm:$0xff]
        %v498 = vld [vmem:[%s401 + $0x108] sm:$0xff]
        %v499 = vld [vmem:[%s401 + $0x110] sm:$0xff]
        %v500 = vld [vmem:[%s401 + $0x118] sm:$0xff]
        %v501 = vld [vmem:[%s401 + $0x120] sm:$0xff]
        %v502 = vld [vmem:[%s401 + $0x128] sm:$0xff]
        %v503 = vld [vmem:[%s401 + $0x130] sm:$0xff]
        %v504 = vld [vmem:[%s401 + $0x138] sm:$0xff]
        %v505 = vld [vmem:[%s401 + $0x140] sm:$0xff]
        %v506 = vld [vmem:[%s401 + $0x148] sm:$0xff]
        %v507 = vld [vmem:[%s401 + $0x150] sm:$0xff]
        %v508 = vld [vmem:[%s401 + $0x158] sm:$0xff]
        %v509 = vld [vmem:[%s401 + $0x160] sm:$0xff]
        %v510 = vld [vmem:[%s401 + $0x168] sm:$0xff]
        %v511 = vld [vmem:[%s401 + $0x170] sm:$0xff]
        %v512 = vld [vmem:[%s401 + $0x178] sm:$0xff]
        %v513 = vld [vmem:[%s401 + $0x180] sm:$0xff]
        %v514 = vld [vmem:[%s401 + $0x188] sm:$0xff]
        %v515 = vld [vmem:[%s401 + $0x190] sm:$0xff]
        %v516 = vld [vmem:[%s401 + $0x198] sm:$0xff]
        %v517 = vld [vmem:[%s401 + $0x1a0] sm:$0xff]
        %v518 = vld [vmem:[%s401 + $0x1a8] sm:$0xff]
        %v519 = vld [vmem:[%s401 + $0x1b0] sm:$0xff]
        %v520 = vld [vmem:[%s401 + $0x1b8] sm:$0xff]
        %v521 = vld [vmem:[%s401 + $0x1c0] sm:$0xff]
        %v522 = vld [vmem:[%s401 + $0x1c8] sm:$0xff]
        %v523 = vld [vmem:[%s401 + $0x1d0] sm:$0xff]
        %v524 = vld [vmem:[%s401 + $0x1d8] sm:$0xff]
        %v525 = vld [vmem:[%s401 + $0x1e0] sm:$0xff]
        %v526 = vld [vmem:[%s401 + $0x1e8] sm:$0xff]
        %v527 = vld [vmem:[%s401 + $0x1f0] sm:$0xff]
        %v528 = vld [vmem:[%s401 + $0x1f8] sm:$0xff]
        %v529 = vld [vmem:[%s401 + $0x200] sm:$0xff]
        %v530 = vld [vmem:[%s401 + $0x208] sm:$0xff]
        %v531 = vld [vmem:[%s401 + $0x210] sm:$0xff]
        %v532 = vld [vmem:[%s401 + $0x218] sm:$0xff]
        %v533 = vld [vmem:[%s401 + $0x220] sm:$0xff]
        %v534 = vld [vmem:[%s401 + $0x228] sm:$0xff]
        %v535 = vld [vmem:[%s401 + $0x230] sm:$0xff]
        %v536 = vld [vmem:[%s401 + $0x238] sm:$0xff]
        %v537 = vld [vmem:[%s401 + $0x240] sm:$0xff]
        %v538 = vld [vmem:[%s401 + $0x248] sm:$0xff]
        %v539 = vld [vmem:[%s401 + $0x250] sm:$0xff]
        %v540 = vld [vmem:[%s401 + $0x258] sm:$0xff]
        %v541 = vld [vmem:[%s401 + $0x260] sm:$0xff]
        %v542 = vld [vmem:[%s401 + $0x268] sm:$0xff]
        %v543 = vld [vmem:[%s401 + $0x270] sm:$0xff]
        %v544 = vld [vmem:[%s401 + $0x278] sm:$0xff]
        %v545 = vld [vmem:[%s401 + $0x280] sm:$0xff]
        %v546 = vld [vmem:[%s401 + $0x288] sm:$0xff]
        %v547 = vld [vmem:[%s401 + $0x290] sm:$0xff]
        %v548 = vld [vmem:[%s401 + $0x298] sm:$0xff]
        %v549 = vld [vmem:[%s401 + $0x2a0] sm:$0xff]
        %v550 = vld [vmem:[%s401 + $0x2a8] sm:$0xff]
        %v551 = vld [vmem:[%s401 + $0x2b0] sm:$0xff]
        %v552 = vld [vmem:[%s401 + $0x2b8] sm:$0xff]
        %v553 = vld [vmem:[%s401 + $0x2c0] sm:$0xff]
        %v554 = vld [vmem:[%s401 + $0x2c8] sm:$0xff]
        %v555 = vld [vmem:[%s401 + $0x2d0] sm:$0xff]
        %v556 = vld [vmem:[%s401 + $0x2d8] sm:$0xff]
        %v557 = vld [vmem:[%s401 + $0x2e0] sm:$0xff]
        %v558 = vld [vmem:[%s401 + $0x2e8] sm:$0xff]
        %v559 = vld [vmem:[%s401 + $0x2f0] sm:$0xff]
        %v560 = vld [vmem:[%s401 + $0x2f8] sm:$0xff]
        %v561 = vld [vmem:[%s401 + $0x300] sm:$0xff]
        %v562 = vld [vmem:[%s401 + $0x308] sm:$0xff]
        %v563 = vld [vmem:[%s401 + $0x310] sm:$0xff]
        %v564 = vld [vmem:[%s401 + $0x318] sm:$0xff]
        %v565 = vld [vmem:[%s401 + $0x320] sm:$0xff]
        %v566 = vld [vmem:[%s401 + $0x328] sm:$0xff]
        %v567 = vld [vmem:[%s401 + $0x330] sm:$0xff]
        %v568 = vld [vmem:[%s401 + $0x338] sm:$0xff]
        %v569 = vld [vmem:[%s401 + $0x340] sm:$0xff]
        %v570 = vld [vmem:[%s401 + $0x348] sm:$0xff]
        %v571 = vld [vmem:[%s401 + $0x350] sm:$0xff]
        %v572 = vld [vmem:[%s401 + $0x358] sm:$0xff]
        %v573 = vld [vmem:[%s401 + $0x360] sm:$0xff]
        %v574 = vld [vmem:[%s401 + $0x368] sm:$0xff]
        %v575 = vld [vmem:[%s401 + $0x370] sm:$0xff]
        %v576 = vld [vmem:[%s401 + $0x378] sm:$0xff]
        %v577 = vld [vmem:[%s401 + $0x380] sm:$0xff]
        %v578 = vld [vmem:[%s401 + $0x388] sm:$0xff]
        %v579 = vld [vmem:[%s401 + $0x390] sm:$0xff]
        %v580 = vld [vmem:[%s401 + $0x398] sm:$0xff]
        %v581 = vld [vmem:[%s401 + $0x3a0] sm:$0xff]
        %v582 = vld [vmem:[%s401 + $0x3a8] sm:$0xff]
        %v583 = vld [vmem:[%s401 + $0x3b0] sm:$0xff]
        %v584 = vld [vmem:[%s401 + $0x3b8] sm:$0xff]
        %v585 = vld [vmem:[%s401 + $0x3c0] sm:$0xff]
        %v586 = vld [vmem:[%s401 + $0x3c8] sm:$0xff]
        %v587 = vld [vmem:[%s401 + $0x3d0] sm:$0xff]
        %v588 = vld [vmem:[%s401 + $0x3d8] sm:$0xff]
        %v589 = vld [vmem:[%s401 + $0x3e0] sm:$0xff]
        %v590 = vld [vmem:[%s401 + $0x3e8] sm:$0xff]
        %v591 = vld [vmem:[%s401 + $0x3f0] sm:$0xff]
        %v592 = vld [vmem:[%s401 + $0x3f8] sm:$0xff]
        %v595 = vunpack.c.l.s4 1966171168
        %v596 = vunpack.c.0.s8 %v595
        %v597 = vlaneseq
        %v598 = vshrl.u32 %v597, 7
        %v599 = vsub.s32 %v596, %v598
        %v600 = vrot.slane %v464, %v599
        %v601 = vcombine.high %v600, %v600
        %v603 = vunpack.c.l.s4 1966171168
        %v604 = vunpack.c.0.s8 %v603
        %v605 = vlaneseq
        %v606 = vshrl.u32 %v605, 7
        %v607 = vsub.s32 %v604, %v606
        %v608 = vrot.slane %v600, %v607
        %v610 = vunpack.c.l.s4 1966171168
        %v611 = vunpack.c.0.s8 %v610
        %v612 = vlaneseq
        %v613 = vshrl.u32 %v612, 7
        %v614 = vsub.s32 %v611, %v613
        %v615 = vrot.slane %v601, %v614
        %v616 = vcombine.high %v608, %v608
        %v617 = vcombine.high %v615, %v615
        %v750 = vunpack.c.l.b16 %v465
        %v751 = vunpack.c.h.b16 %v465
        %v752 = vunpack.c.l.b16 %v466
        %v753 = vunpack.c.h.b16 %v466
        %v754 = vunpack.c.l.b16 %v467
        %v755 = vunpack.c.h.b16 %v467
        %v756 = vunpack.c.l.b16 %v468
        %v757 = vunpack.c.h.b16 %v468
        %v758 = vunpack.c.l.b16 %v469
        %v759 = vunpack.c.h.b16 %v469
        %v760 = vunpack.c.l.b16 %v470
        %v761 = vunpack.c.h.b16 %v470
        %v762 = vunpack.c.l.b16 %v471
        %v763 = vunpack.c.h.b16 %v471
        %v764 = vunpack.c.l.b16 %v472
        %v765 = vunpack.c.h.b16 %v472
        %v766 = vunpack.c.l.b16 %v473
        %v767 = vunpack.c.h.b16 %v473
        %v768 = vunpack.c.l.b16 %v474
        %v769 = vunpack.c.h.b16 %v474
        %v770 = vunpack.c.l.b16 %v475
        %v771 = vunpack.c.h.b16 %v475
        %v772 = vunpack.c.l.b16 %v476
        %v773 = vunpack.c.h.b16 %v476
        %v774 = vunpack.c.l.b16 %v477
        %v775 = vunpack.c.h.b16 %v477
        %v776 = vunpack.c.l.b16 %v478
        %v777 = vunpack.c.h.b16 %v478
        %v778 = vunpack.c.l.b16 %v479
        %v779 = vunpack.c.h.b16 %v479
        %v780 = vunpack.c.l.b16 %v480
        %v781 = vunpack.c.h.b16 %v480
        %v782 = vunpack.c.l.b16 %v481
        %v783 = vunpack.c.h.b16 %v481
        %v784 = vunpack.c.l.b16 %v482
        %v785 = vunpack.c.h.b16 %v482
        %v786 = vunpack.c.l.b16 %v483
        %v787 = vunpack.c.h.b16 %v483
        %v788 = vunpack.c.l.b16 %v484
        %v789 = vunpack.c.h.b16 %v484
        %v790 = vunpack.c.l.b16 %v485
        %v791 = vunpack.c.h.b16 %v485
        %v792 = vunpack.c.l.b16 %v486
        %v793 = vunpack.c.h.b16 %v486
        %v794 = vunpack.c.l.b16 %v487
        %v795 = vunpack.c.h.b16 %v487
        %v796 = vunpack.c.l.b16 %v488
        %v797 = vunpack.c.h.b16 %v488
        %v798 = vunpack.c.l.b16 %v489
        %v799 = vunpack.c.h.b16 %v489
        %v800 = vunpack.c.l.b16 %v490
        %v801 = vunpack.c.h.b16 %v490
        %v802 = vunpack.c.l.b16 %v491
        %v803 = vunpack.c.h.b16 %v491
        %v804 = vunpack.c.l.b16 %v492
        %v805 = vunpack.c.h.b16 %v492
        %v806 = vunpack.c.l.b16 %v493
        %v807 = vunpack.c.h.b16 %v493
        %v808 = vunpack.c.l.b16 %v494
        %v809 = vunpack.c.h.b16 %v494
        %v810 = vunpack.c.l.b16 %v495
        %v811 = vunpack.c.h.b16 %v495
        %v812 = vunpack.c.l.b16 %v496
        %v813 = vunpack.c.h.b16 %v496
        %v814 = vunpack.c.l.b16 %v497
        %v815 = vunpack.c.h.b16 %v497
        %v816 = vunpack.c.l.b16 %v498
        %v817 = vunpack.c.h.b16 %v498
        %v818 = vunpack.c.l.b16 %v499
        %v819 = vunpack.c.h.b16 %v499
        %v820 = vunpack.c.l.b16 %v500
        %v821 = vunpack.c.h.b16 %v500
        %v822 = vunpack.c.l.b16 %v501
        %v823 = vunpack.c.h.b16 %v501
        %v824 = vunpack.c.l.b16 %v502
        %v825 = vunpack.c.h.b16 %v502
        %v826 = vunpack.c.l.b16 %v503
        %v827 = vunpack.c.h.b16 %v503
        %v828 = vunpack.c.l.b16 %v504
        %v829 = vunpack.c.h.b16 %v504
        %v830 = vunpack.c.l.b16 %v505
        %v831 = vunpack.c.h.b16 %v505
        %v832 = vunpack.c.l.b16 %v506
        %v833 = vunpack.c.h.b16 %v506
        %v834 = vunpack.c.l.b16 %v507
        %v835 = vunpack.c.h.b16 %v507
        %v836 = vunpack.c.l.b16 %v508
        %v837 = vunpack.c.h.b16 %v508
        %v838 = vunpack.c.l.b16 %v509
        %v839 = vunpack.c.h.b16 %v509
        %v840 = vunpack.c.l.b16 %v510
        %v841 = vunpack.c.h.b16 %v510
        %v842 = vunpack.c.l.b16 %v511
        %v843 = vunpack.c.h.b16 %v511
        %v844 = vunpack.c.l.b16 %v512
        %v845 = vunpack.c.h.b16 %v512
        %v846 = vunpack.c.l.b16 %v513
        %v847 = vunpack.c.h.b16 %v513
        %v848 = vunpack.c.l.b16 %v514
        %v849 = vunpack.c.h.b16 %v514
        %v850 = vunpack.c.l.b16 %v515
        %v851 = vunpack.c.h.b16 %v515
        %v852 = vunpack.c.l.b16 %v516
        %v853 = vunpack.c.h.b16 %v516
        %v854 = vunpack.c.l.b16 %v517
        %v855 = vunpack.c.h.b16 %v517
        %v856 = vunpack.c.l.b16 %v518
        %v857 = vunpack.c.h.b16 %v518
        %v858 = vunpack.c.l.b16 %v519
        %v859 = vunpack.c.h.b16 %v519
        %v860 = vunpack.c.l.b16 %v520
        %v861 = vunpack.c.h.b16 %v520
        %v862 = vunpack.c.l.b16 %v521
        %v863 = vunpack.c.h.b16 %v521
        %v864 = vunpack.c.l.b16 %v522
        %v865 = vunpack.c.h.b16 %v522
        %v866 = vunpack.c.l.b16 %v523
        %v867 = vunpack.c.h.b16 %v523
        %v868 = vunpack.c.l.b16 %v524
        %v869 = vunpack.c.h.b16 %v524
        %v870 = vunpack.c.l.b16 %v525
        %v871 = vunpack.c.h.b16 %v525
        %v872 = vunpack.c.l.b16 %v526
        %v873 = vunpack.c.h.b16 %v526
        %v874 = vunpack.c.l.b16 %v527
        %v875 = vunpack.c.h.b16 %v527
        %v876 = vunpack.c.l.b16 %v528
        %v877 = vunpack.c.h.b16 %v528
        %v878 = vunpack.c.l.b16 %v529
        %v879 = vunpack.c.h.b16 %v529
        %v880 = vunpack.c.l.b16 %v530
        %v881 = vunpack.c.h.b16 %v530
        %v882 = vunpack.c.l.b16 %v531
        %v883 = vunpack.c.h.b16 %v531
        %v884 = vunpack.c.l.b16 %v532
        %v885 = vunpack.c.h.b16 %v532
        %v886 = vunpack.c.l.b16 %v533
        %v887 = vunpack.c.h.b16 %v533
        %v888 = vunpack.c.l.b16 %v534
        %v889 = vunpack.c.h.b16 %v534
        %v890 = vunpack.c.l.b16 %v535
        %v891 = vunpack.c.h.b16 %v535
        %v892 = vunpack.c.l.b16 %v536
        %v893 = vunpack.c.h.b16 %v536
        %v894 = vunpack.c.l.b16 %v537
        %v895 = vunpack.c.h.b16 %v537
        %v896 = vunpack.c.l.b16 %v538
        %v897 = vunpack.c.h.b16 %v538
        %v898 = vunpack.c.l.b16 %v539
        %v899 = vunpack.c.h.b16 %v539
        %v900 = vunpack.c.l.b16 %v540
        %v901 = vunpack.c.h.b16 %v540
        %v902 = vunpack.c.l.b16 %v541
        %v903 = vunpack.c.h.b16 %v541
        %v904 = vunpack.c.l.b16 %v542
        %v905 = vunpack.c.h.b16 %v542
        %v906 = vunpack.c.l.b16 %v543
        %v907 = vunpack.c.h.b16 %v543
        %v908 = vunpack.c.l.b16 %v544
        %v909 = vunpack.c.h.b16 %v544
        %v910 = vunpack.c.l.b16 %v545
        %v911 = vunpack.c.h.b16 %v545
        %v912 = vunpack.c.l.b16 %v546
        %v913 = vunpack.c.h.b16 %v546
        %v914 = vunpack.c.l.b16 %v547
        %v915 = vunpack.c.h.b16 %v547
        %v916 = vunpack.c.l.b16 %v548
        %v917 = vunpack.c.h.b16 %v548
        %v918 = vunpack.c.l.b16 %v549
        %v919 = vunpack.c.h.b16 %v549
        %v920 = vunpack.c.l.b16 %v550
        %v921 = vunpack.c.h.b16 %v550
        %v922 = vunpack.c.l.b16 %v551
        %v923 = vunpack.c.h.b16 %v551
        %v924 = vunpack.c.l.b16 %v552
        %v925 = vunpack.c.h.b16 %v552
        %v926 = vunpack.c.l.b16 %v553
        %v927 = vunpack.c.h.b16 %v553
        %v928 = vunpack.c.l.b16 %v554
        %v929 = vunpack.c.h.b16 %v554
        %v930 = vunpack.c.l.b16 %v555
        %v931 = vunpack.c.h.b16 %v555
        %v932 = vunpack.c.l.b16 %v556
        %v933 = vunpack.c.h.b16 %v556
        %v934 = vunpack.c.l.b16 %v557
        %v935 = vunpack.c.h.b16 %v557
        %v936 = vunpack.c.l.b16 %v558
        %v937 = vunpack.c.h.b16 %v558
        %v938 = vunpack.c.l.b16 %v559
        %v939 = vunpack.c.h.b16 %v559
        %v940 = vunpack.c.l.b16 %v560
        %v941 = vunpack.c.h.b16 %v560
        %v942 = vunpack.c.l.b16 %v561
        %v943 = vunpack.c.h.b16 %v561
        %v944 = vunpack.c.l.b16 %v562
        %v945 = vunpack.c.h.b16 %v562
        %v946 = vunpack.c.l.b16 %v563
        %v947 = vunpack.c.h.b16 %v563
        %v948 = vunpack.c.l.b16 %v564
        %v949 = vunpack.c.h.b16 %v564
        %v950 = vunpack.c.l.b16 %v565
        %v951 = vunpack.c.h.b16 %v565
        %v952 = vunpack.c.l.b16 %v566
        %v953 = vunpack.c.h.b16 %v566
        %v954 = vunpack.c.l.b16 %v567
        %v955 = vunpack.c.h.b16 %v567
        %v956 = vunpack.c.l.b16 %v568
        %v957 = vunpack.c.h.b16 %v568
        %v958 = vunpack.c.l.b16 %v569
        %v959 = vunpack.c.h.b16 %v569
        %v960 = vunpack.c.l.b16 %v570
        %v961 = vunpack.c.h.b16 %v570
        %v962 = vunpack.c.l.b16 %v571
        %v963 = vunpack.c.h.b16 %v571
        %v964 = vunpack.c.l.b16 %v572
        %v965 = vunpack.c.h.b16 %v572
        %v966 = vunpack.c.l.b16 %v573
        %v967 = vunpack.c.h.b16 %v573
        %v968 = vunpack.c.l.b16 %v574
        %v969 = vunpack.c.h.b16 %v574
        %v970 = vunpack.c.l.b16 %v575
        %v971 = vunpack.c.h.b16 %v575
        %v972 = vunpack.c.l.b16 %v576
        %v973 = vunpack.c.h.b16 %v576
        %v974 = vunpack.c.l.b16 %v577
        %v975 = vunpack.c.h.b16 %v577
        %v976 = vunpack.c.l.b16 %v578
        %v977 = vunpack.c.h.b16 %v578
        %v978 = vunpack.c.l.b16 %v579
        %v979 = vunpack.c.h.b16 %v579
        %v980 = vunpack.c.l.b16 %v580
        %v981 = vunpack.c.h.b16 %v580
        %v982 = vunpack.c.l.b16 %v581
        %v983 = vunpack.c.h.b16 %v581
        %v984 = vunpack.c.l.b16 %v582
        %v985 = vunpack.c.h.b16 %v582
        %v986 = vunpack.c.l.b16 %v583
        %v987 = vunpack.c.h.b16 %v583
        %v988 = vunpack.c.l.b16 %v584
        %v989 = vunpack.c.h.b16 %v584
        %v990 = vunpack.c.l.b16 %v585
        %v991 = vunpack.c.h.b16 %v585
        %v992 = vunpack.c.l.b16 %v586
        %v993 = vunpack.c.h.b16 %v586
        %v994 = vunpack.c.l.b16 %v587
        %v995 = vunpack.c.h.b16 %v587
        %v996 = vunpack.c.l.b16 %v588
        %v997 = vunpack.c.h.b16 %v588
        %v998 = vunpack.c.l.b16 %v589
        %v999 = vunpack.c.h.b16 %v589
        %v1000 = vunpack.c.l.b16 %v590
        %v1001 = vunpack.c.h.b16 %v590
        %v1002 = vunpack.c.l.b16 %v591
        %v1003 = vunpack.c.h.b16 %v591
        %v1004 = vunpack.c.l.b16 %v592
        %v1005 = vunpack.c.h.b16 %v592
        %v1006 = vpack.c.b16 %v754, %v750
        %v1007 = vpack.c.b16 %v755, %v751
        %v1008 = vpack.c.b16 %v756, %v752
        %v1009 = vpack.c.b16 %v757, %v753
        %v1010 = vpack.c.b16 %v762, %v758
        %v1011 = vpack.c.b16 %v763, %v759
        %v1012 = vpack.c.b16 %v764, %v760
        %v1013 = vpack.c.b16 %v765, %v761
        %v1014 = vpack.c.b16 %v770, %v766
        %v1015 = vpack.c.b16 %v771, %v767
        %v1016 = vpack.c.b16 %v772, %v768
        %v1017 = vpack.c.b16 %v773, %v769
        %v1018 = vpack.c.b16 %v778, %v774
        %v1019 = vpack.c.b16 %v779, %v775
        %v1020 = vpack.c.b16 %v780, %v776
        %v1021 = vpack.c.b16 %v781, %v777
        %v1022 = vpack.c.b16 %v786, %v782
        %v1023 = vpack.c.b16 %v787, %v783
        %v1024 = vpack.c.b16 %v788, %v784
        %v1025 = vpack.c.b16 %v789, %v785
        %v1026 = vpack.c.b16 %v794, %v790
        %v1027 = vpack.c.b16 %v795, %v791
        %v1028 = vpack.c.b16 %v796, %v792
        %v1029 = vpack.c.b16 %v797, %v793
        %v1030 = vpack.c.b16 %v802, %v798
        %v1031 = vpack.c.b16 %v803, %v799
        %v1032 = vpack.c.b16 %v804, %v800
        %v1033 = vpack.c.b16 %v805, %v801
        %v1034 = vpack.c.b16 %v810, %v806
        %v1035 = vpack.c.b16 %v811, %v807
        %v1036 = vpack.c.b16 %v812, %v808
        %v1037 = vpack.c.b16 %v813, %v809
        %v1038 = vpack.c.b16 %v818, %v814
        %v1039 = vpack.c.b16 %v819, %v815
        %v1040 = vpack.c.b16 %v820, %v816
        %v1041 = vpack.c.b16 %v821, %v817
        %v1042 = vpack.c.b16 %v826, %v822
        %v1043 = vpack.c.b16 %v827, %v823
        %v1044 = vpack.c.b16 %v828, %v824
        %v1045 = vpack.c.b16 %v829, %v825
        %v1046 = vpack.c.b16 %v834, %v830
        %v1047 = vpack.c.b16 %v835, %v831
        %v1048 = vpack.c.b16 %v836, %v832
        %v1049 = vpack.c.b16 %v837, %v833
        %v1050 = vpack.c.b16 %v842, %v838
        %v1051 = vpack.c.b16 %v843, %v839
        %v1052 = vpack.c.b16 %v844, %v840
        %v1053 = vpack.c.b16 %v845, %v841
        %v1054 = vpack.c.b16 %v850, %v846
        %v1055 = vpack.c.b16 %v851, %v847
        %v1056 = vpack.c.b16 %v852, %v848
        %v1057 = vpack.c.b16 %v853, %v849
        %v1058 = vpack.c.b16 %v858, %v854
        %v1059 = vpack.c.b16 %v859, %v855
        %v1060 = vpack.c.b16 %v860, %v856
        %v1061 = vpack.c.b16 %v861, %v857
        %v1062 = vpack.c.b16 %v866, %v862
        %v1063 = vpack.c.b16 %v867, %v863
        %v1064 = vpack.c.b16 %v868, %v864
        %v1065 = vpack.c.b16 %v869, %v865
        %v1066 = vpack.c.b16 %v874, %v870
        %v1067 = vpack.c.b16 %v875, %v871
        %v1068 = vpack.c.b16 %v876, %v872
        %v1069 = vpack.c.b16 %v877, %v873
        %v1070 = vpack.c.b16 %v882, %v878
        %v1071 = vpack.c.b16 %v883, %v879
        %v1072 = vpack.c.b16 %v884, %v880
        %v1073 = vpack.c.b16 %v885, %v881
        %v1074 = vpack.c.b16 %v890, %v886
        %v1075 = vpack.c.b16 %v891, %v887
        %v1076 = vpack.c.b16 %v892, %v888
        %v1077 = vpack.c.b16 %v893, %v889
        %v1078 = vpack.c.b16 %v898, %v894
        %v1079 = vpack.c.b16 %v899, %v895
        %v1080 = vpack.c.b16 %v900, %v896
        %v1081 = vpack.c.b16 %v901, %v897
        %v1082 = vpack.c.b16 %v906, %v902
        %v1083 = vpack.c.b16 %v907, %v903
        %v1084 = vpack.c.b16 %v908, %v904
        %v1085 = vpack.c.b16 %v909, %v905
        %v1086 = vpack.c.b16 %v914, %v910
        %v1087 = vpack.c.b16 %v915, %v911
        %v1088 = vpack.c.b16 %v916, %v912
        %v1089 = vpack.c.b16 %v917, %v913
        %v1090 = vpack.c.b16 %v922, %v918
        %v1091 = vpack.c.b16 %v923, %v919
        %v1092 = vpack.c.b16 %v924, %v920
        %v1093 = vpack.c.b16 %v925, %v921
        %v1094 = vpack.c.b16 %v930, %v926
        %v1095 = vpack.c.b16 %v931, %v927
        %v1096 = vpack.c.b16 %v932, %v928
        %v1097 = vpack.c.b16 %v933, %v929
        %v1098 = vpack.c.b16 %v938, %v934
        %v1099 = vpack.c.b16 %v939, %v935
        %v1100 = vpack.c.b16 %v940, %v936
        %v1101 = vpack.c.b16 %v941, %v937
        %v1102 = vpack.c.b16 %v946, %v942
        %v1103 = vpack.c.b16 %v947, %v943
        %v1104 = vpack.c.b16 %v948, %v944
        %v1105 = vpack.c.b16 %v949, %v945
        %v1106 = vpack.c.b16 %v954, %v950
        %v1107 = vpack.c.b16 %v955, %v951
        %v1108 = vpack.c.b16 %v956, %v952
        %v1109 = vpack.c.b16 %v957, %v953
        %v1110 = vpack.c.b16 %v962, %v958
        %v1111 = vpack.c.b16 %v963, %v959
        %v1112 = vpack.c.b16 %v964, %v960
        %v1113 = vpack.c.b16 %v965, %v961
        %v1114 = vpack.c.b16 %v970, %v966
        %v1115 = vpack.c.b16 %v971, %v967
        %v1116 = vpack.c.b16 %v972, %v968
        %v1117 = vpack.c.b16 %v973, %v969
        %v1118 = vpack.c.b16 %v978, %v974
        %v1119 = vpack.c.b16 %v979, %v975
        %v1120 = vpack.c.b16 %v980, %v976
        %v1121 = vpack.c.b16 %v981, %v977
        %v1122 = vpack.c.b16 %v986, %v982
        %v1123 = vpack.c.b16 %v987, %v983
        %v1124 = vpack.c.b16 %v988, %v984
        %v1125 = vpack.c.b16 %v989, %v985
        %v1126 = vpack.c.b16 %v994, %v990
        %v1127 = vpack.c.b16 %v995, %v991
        %v1128 = vpack.c.b16 %v996, %v992
        %v1129 = vpack.c.b16 %v997, %v993
        %v1130 = vpack.c.b16 %v1002, %v998
        %v1131 = vpack.c.b16 %v1003, %v999
        %v1132 = vpack.c.b16 %v1004, %v1000
        %v1133 = vpack.c.b16 %v1005, %v1001
        %1262 = vmatprep.subr.bf16.mxu0 %v1007
        %1263 = vmatpush1.bf16.msra.mxu0 %v1006
        %1264 = vmatprep.subr.bf16.mxu0 %v1011
        %1265 = vmatpush1.bf16.msra.mxu0 %v1010
        %1266 = vmatprep.subr.bf16.mxu0 %v1015
        %1267 = vmatpush1.bf16.msra.mxu0 %v1014
        %1268 = vmatprep.subr.bf16.mxu0 %v1019
        %1269 = vmatpush1.bf16.msra.mxu0 %v1018
        %1270 = vmatprep.subr.bf16.mxu0 %v1023
        %1271 = vmatpush1.bf16.msra.mxu0 %v1022
        %1272 = vmatprep.subr.bf16.mxu0 %v1027
        %1273 = vmatpush1.bf16.msra.mxu0 %v1026
        %1274 = vmatprep.subr.bf16.mxu0 %v1031
        %1275 = vmatpush1.bf16.msra.mxu0 %v1030
        %1276 = vmatprep.subr.bf16.mxu0 %v1035
        %1277 = vmatpush1.bf16.msra.mxu0 %v1034
        %1278 = vmatprep.subr.bf16.mxu0 %v1039
        %1279 = vmatpush1.bf16.msra.mxu0 %v1038
        %1280 = vmatprep.subr.bf16.mxu0 %v1043
        %1281 = vmatpush1.bf16.msra.mxu0 %v1042
        %1282 = vmatprep.subr.bf16.mxu0 %v1047
        %1283 = vmatpush1.bf16.msra.mxu0 %v1046
        %1284 = vmatprep.subr.bf16.mxu0 %v1051
        %1285 = vmatpush1.bf16.msra.mxu0 %v1050
        %1286 = vmatprep.subr.bf16.mxu0 %v1055
        %1287 = vmatpush1.bf16.msra.mxu0 %v1054
        %1288 = vmatprep.subr.bf16.mxu0 %v1059
        %1289 = vmatpush1.bf16.msra.mxu0 %v1058
        %1290 = vmatprep.subr.bf16.mxu0 %v1063
        %1291 = vmatpush1.bf16.msra.mxu0 %v1062
        %1292 = vmatprep.subr.bf16.mxu0 %v1067
        %1293 = vmatpush1.bf16.msra.mxu0 %v1066
        %1294 = vmatprep.mubr.bf16.mxu0 %v615
        %1295 = vmatmul.mubr.bf16.gmra.mrb[0].mxu0 %v608
        %v1296 = vpop.f32.mrb[0].mxu0
        %v1297 = vadd.f32 0.0, %v1296
        %v1298 = vpop.f32.mrb[0].mxu0
        %v1299 = vadd.f32 0.0, %v1298
        %v1300 = vpop.f32.mrb[0].mxu0
        %v1301 = vpop.f32.mrb[0].mxu0
        %1302 = vdwg.mxu0
        %1303 = vmatprep.subr.bf16.mxu0 %v1071
        %1304 = vmatpush1.bf16.msra.mxu0 %v1070
        %1305 = vmatprep.subr.bf16.mxu0 %v1075
        %1306 = vmatpush1.bf16.msra.mxu0 %v1074
        %1307 = vmatprep.subr.bf16.mxu0 %v1079
        %1308 = vmatpush1.bf16.msra.mxu0 %v1078
        %1309 = vmatprep.subr.bf16.mxu0 %v1083
        %1310 = vmatpush1.bf16.msra.mxu0 %v1082
        %1311 = vmatprep.subr.bf16.mxu0 %v1087
        %1312 = vmatpush1.bf16.msra.mxu0 %v1086
        %1313 = vmatprep.subr.bf16.mxu0 %v1091
        %1314 = vmatpush1.bf16.msra.mxu0 %v1090
        %1315 = vmatprep.subr.bf16.mxu0 %v1095
        %1316 = vmatpush1.bf16.msra.mxu0 %v1094
        %1317 = vmatprep.subr.bf16.mxu0 %v1099
        %1318 = vmatpush1.bf16.msra.mxu0 %v1098
        %1319 = vmatprep.subr.bf16.mxu0 %v1103
        %1320 = vmatpush1.bf16.msra.mxu0 %v1102
        %1321 = vmatprep.subr.bf16.mxu0 %v1107
        %1322 = vmatpush1.bf16.msra.mxu0 %v1106
        %1323 = vmatprep.subr.bf16.mxu0 %v1111
        %1324 = vmatpush1.bf16.msra.mxu0 %v1110
        %1325 = vmatprep.subr.bf16.mxu0 %v1115
        %1326 = vmatpush1.bf16.msra.mxu0 %v1114
        %1327 = vmatprep.subr.bf16.mxu0 %v1119
        %1328 = vmatpush1.bf16.msra.mxu0 %v1118
        %1329 = vmatprep.subr.bf16.mxu0 %v1123
        %1330 = vmatpush1.bf16.msra.mxu0 %v1122
        %1331 = vmatprep.subr.bf16.mxu0 %v1127
        %1332 = vmatpush1.bf16.msra.mxu0 %v1126
        %1333 = vmatprep.subr.bf16.mxu0 %v1131
        %1334 = vmatpush1.bf16.msra.mxu0 %v1130
        %1335 = vmatprep.mubr.bf16.mxu0 %v617
        %1336 = vmatmul.mubr.bf16.gmra.mrb[0].mxu0 %v616
        %v1337 = vpop.f32.mrb[0].mxu0
        %v1338 = vadd.f32 %v1297, %v1337
        %v1339 = vpop.f32.mrb[0].mxu0
        %v1340 = vadd.f32 %v1299, %v1339
        %v1341 = vpop.f32.mrb[0].mxu0
        %v1342 = vpop.f32.mrb[0].mxu0
        %1343 = vdwg.mxu0
        %1344 = vmatprep.subr.bf16.mxu0 %v1009
        %1345 = vmatpush1.bf16.msra.mxu0 %v1008
        %1346 = vmatprep.subr.bf16.mxu0 %v1013
        %1347 = vmatpush1.bf16.msra.mxu0 %v1012
        %1348 = vmatprep.subr.bf16.mxu0 %v1017
        %1349 = vmatpush1.bf16.msra.mxu0 %v1016
        %1350 = vmatprep.subr.bf16.mxu0 %v1021
        %1351 = vmatpush1.bf16.msra.mxu0 %v1020
        %1352 = vmatprep.subr.bf16.mxu0 %v1025
        %1353 = vmatpush1.bf16.msra.mxu0 %v1024
        %1354 = vmatprep.subr.bf16.mxu0 %v1029
        %1355 = vmatpush1.bf16.msra.mxu0 %v1028
        %1356 = vmatprep.subr.bf16.mxu0 %v1033
        %1357 = vmatpush1.bf16.msra.mxu0 %v1032
        %1358 = vmatprep.subr.bf16.mxu0 %v1037
        %1359 = vmatpush1.bf16.msra.mxu0 %v1036
        %1360 = vmatprep.subr.bf16.mxu0 %v1041
        %1361 = vmatpush1.bf16.msra.mxu0 %v1040
        %1362 = vmatprep.subr.bf16.mxu0 %v1045
        %1363 = vmatpush1.bf16.msra.mxu0 %v1044
        %1364 = vmatprep.subr.bf16.mxu0 %v1049
        %1365 = vmatpush1.bf16.msra.mxu0 %v1048
        %1366 = vmatprep.subr.bf16.mxu0 %v1053
        %1367 = vmatpush1.bf16.msra.mxu0 %v1052
        %1368 = vmatprep.subr.bf16.mxu0 %v1057
        %1369 = vmatpush1.bf16.msra.mxu0 %v1056
        %1370 = vmatprep.subr.bf16.mxu0 %v1061
        %1371 = vmatpush1.bf16.msra.mxu0 %v1060
        %1372 = vmatprep.subr.bf16.mxu0 %v1065
        %1373 = vmatpush1.bf16.msra.mxu0 %v1064
        %1374 = vmatprep.subr.bf16.mxu0 %v1069
        %1375 = vmatpush1.bf16.msra.mxu0 %v1068
        %1376 = vmatprep.mubr.bf16.mxu0 %v615
        %1377 = vmatmul.mubr.bf16.gmra.mrb[0].mxu0 %v608
        %v1378 = vpop.f32.mrb[0].mxu0
        %v1379 = vadd.f32 0.0, %v1378
        %v1380 = vpop.f32.mrb[0].mxu0
        %v1381 = vadd.f32 0.0, %v1380
        %v1382 = vpop.f32.mrb[0].mxu0
        %v1383 = vpop.f32.mrb[0].mxu0
        %1384 = vdwg.mxu0
        %1385 = vmatprep.subr.bf16.mxu0 %v1073
        %1386 = vmatpush1.bf16.msra.mxu0 %v1072
        %1387 = vmatprep.subr.bf16.mxu0 %v1077
        %1388 = vmatpush1.bf16.msra.mxu0 %v1076
        %1389 = vmatprep.subr.bf16.mxu0 %v1081
        %1390 = vmatpush1.bf16.msra.mxu0 %v1080
        %1391 = vmatprep.subr.bf16.mxu0 %v1085
        %1392 = vmatpush1.bf16.msra.mxu0 %v1084
        %1393 = vmatprep.subr.bf16.mxu0 %v1089
        %1394 = vmatpush1.bf16.msra.mxu0 %v1088
        %1395 = vmatprep.subr.bf16.mxu0 %v1093
        %1396 = vmatpush1.bf16.msra.mxu0 %v1092
        %1397 = vmatprep.subr.bf16.mxu0 %v1097
        %1398 = vmatpush1.bf16.msra.mxu0 %v1096
        %1399 = vmatprep.subr.bf16.mxu0 %v1101
        %1400 = vmatpush1.bf16.msra.mxu0 %v1100
        %1401 = vmatprep.subr.bf16.mxu0 %v1105
        %1402 = vmatpush1.bf16.msra.mxu0 %v1104
        %1403 = vmatprep.subr.bf16.mxu0 %v1109
        %1404 = vmatpush1.bf16.msra.mxu0 %v1108
        %1405 = vmatprep.subr.bf16.mxu0 %v1113
        %1406 = vmatpush1.bf16.msra.mxu0 %v1112
        %1407 = vmatprep.subr.bf16.mxu0 %v1117
        %1408 = vmatpush1.bf16.msra.mxu0 %v1116
        %1409 = vmatprep.subr.bf16.mxu0 %v1121
        %1410 = vmatpush1.bf16.msra.mxu0 %v1120
        %1411 = vmatprep.subr.bf16.mxu0 %v1125
        %1412 = vmatpush1.bf16.msra.mxu0 %v1124
        %1413 = vmatprep.subr.bf16.mxu0 %v1129
        %1414 = vmatpush1.bf16.msra.mxu0 %v1128
        %1415 = vmatprep.subr.bf16.mxu0 %v1133
        %1416 = vmatpush1.bf16.msra.mxu0 %v1132
        %1417 = vmatprep.mubr.bf16.mxu0 %v617
        %1418 = vmatmul.mubr.bf16.gmra.mrb[0].mxu0 %v616
        %v1419 = vpop.f32.mrb[0].mxu0
        %v1420 = vadd.f32 %v1379, %v1419
        %v1421 = vpop.f32.mrb[0].mxu0
        %v1422 = vadd.f32 %v1381, %v1421
        %v1423 = vpop.f32.mrb[0].mxu0
        %v1424 = vpop.f32.mrb[0].mxu0
        %1425 = vdwg.mxu0
        %v1430 = vcombine.low %v1338, %v1340
        %v1431 = vcombine.low %v1420, %v1422
        %v1433 = vunpack.c.l.s4 1983009808
        %v1434 = vunpack.c.0.s8 %v1433
        %v1435 = vlaneseq
        %v1436 = vshrl.u32 %v1435, 7
        %v1437 = vsub.s32 %v1434, %v1436
        %v1438 = vrot.slane %v1430, %v1437
        %v1440 = vunpack.c.l.s4 1983009808
        %v1441 = vunpack.c.0.s8 %v1440
        %v1442 = vlaneseq
        %v1443 = vshrl.u32 %v1442, 7
        %v1444 = vsub.s32 %v1441, %v1443
        %v1445 = vrot.slane %v1431, %v1444
        %v1446 = vcombine.low %v1438, %v1445
        %v1448 = vadd.f32 %v463, %v1446
        %1449 = vst [vmem:[#allocation2] sm:$0xff] %v1448
        %p1450 = scmp.eq.s32.totalorder %s27, 1
        // Predicated region
        $region85: #{mt_classifier_3d_forward.1} parent=63 // pred_check
          %p1451 = pneg %p1450
        $region86: #{mt_classifier_3d_forward.1} parent=63 // pred_check_branch
          %1453 = sbr.rel (%p1451) target = $region88
        $region87: #{mt_classifier_3d_forward.1} parent=63 // pred_region
          %v1454 = vld [vmem:[#allocation2] sm:$0xff]
          %v1455 = vld [vmem:[%s2] sm:$0xf]
          %v1457 = vlaneseq
          %v1458 = vshrl.u32 %v1457, 7
          %v1459 = vsub.s32 0, %v1458
          %v1460 = vrot.slane %v1455, %v1459
          %v1461 = vlaneseq
          %v1462 = vshrl.u32 %v1461, 7
          %v1463 = vsub.s32 1, %v1462
          %v1464 = vrot.slane %v1455, %v1463
          %v1465 = vlaneseq
          %v1466 = vshrl.u32 %v1465, 7
          %v1467 = vsub.s32 2, %v1466
          %v1468 = vrot.slane %v1455, %v1467
          %v1469 = vlaneseq
          %v1470 = vshrl.u32 %v1469, 7
          %v1471 = vsub.s32 3, %v1470
          %v1472 = vrot.slane %v1455, %v1471
          %v1473 = vcombine.low %v1460, %v1464
          %v1474 = vcombine.low %v1468, %v1472
          %v1476 = vunpack.c.l.s4 1983009808
          %v1477 = vunpack.c.0.s8 %v1476
          %v1478 = vlaneseq
          %v1479 = vshrl.u32 %v1478, 7
          %v1480 = vsub.s32 %v1477, %v1479
          %v1481 = vrot.slane %v1473, %v1480
          %v1483 = vunpack.c.l.s4 1983009808
          %v1484 = vunpack.c.0.s8 %v1483
          %v1485 = vlaneseq
          %v1486 = vshrl.u32 %v1485, 7
          %v1487 = vsub.s32 %v1484, %v1486
          %v1488 = vrot.slane %v1474, %v1487
          %v1489 = vcombine.low %v1481, %v1488
          %v1491 = vadd.f32 %v1454, %v1489
          %v1493 = vcombine.high %v1491, %v1491
          %v1495 = vunpack.c.l.s4 1983009808
          %v1496 = vunpack.c.0.s8 %v1495
          %v1497 = vlaneseq
          %v1498 = vshrl.u32 %v1497, 7
          %v1499 = vsub.s32 %v1496, %v1498
          %v1500 = vrot.slane %v1491, %v1499
          %v1502 = vunpack.c.l.s4 1983009808
          %v1503 = vunpack.c.0.s8 %v1502
          %v1504 = vlaneseq
          %v1505 = vshrl.u32 %v1504, 7
          %v1506 = vsub.s32 %v1503, %v1505
          %v1507 = vrot.slane %v1493, %v1506
          %v1508 = vcombine.high %v1500, %v1500
          %v1509 = vcombine.high %v1507, %v1507
          %v1514 = vpack.c.bf16 %v1500, %v1500
          %v1515 = vpack.c.bf16 %v1508, %v1508
          %v1516 = vpack.c.bf16 %v1507, %v1507
          %v1517 = vpack.c.bf16 %v1509, %v1509
          %v1518 = vld [vmem:[#allocation5] sm:$0xff]
          %v1519 = vld [vmem:[#allocation5 + $0x8] sm:$0xff]
          %v1520 = vld [vmem:[#allocation5 + $0x10] sm:$0xff]
          %v1521 = vld [vmem:[#allocation5 + $0x18] sm:$0xff]
          %v1522 = vld [vmem:[#allocation5 + $0x20] sm:$0xff]
          %v1523 = vld [vmem:[#allocation5 + $0x28] sm:$0xff]
          %v1524 = vld [vmem:[#allocation5 + $0x30] sm:$0xff]
          %v1525 = vld [vmem:[#allocation5 + $0x38] sm:$0xff]
          %v1526 = vld [vmem:[#allocation5 + $0x40] sm:$0xff]
          %v1527 = vld [vmem:[#allocation5 + $0x48] sm:$0xff]
          %v1528 = vld [vmem:[#allocation5 + $0x50] sm:$0xff]
          %v1529 = vld [vmem:[#allocation5 + $0x58] sm:$0xff]
          %v1530 = vld [vmem:[#allocation5 + $0x60] sm:$0xff]
          %v1531 = vld [vmem:[#allocation5 + $0x68] sm:$0xff]
          %v1532 = vld [vmem:[#allocation5 + $0x70] sm:$0xff]
          %v1533 = vld [vmem:[#allocation5 + $0x78] sm:$0xff]
          %v1534 = vld [vmem:[#allocation5 + $0x80] sm:$0xff]
          %v1535 = vld [vmem:[#allocation5 + $0x88] sm:$0xff]
          %v1536 = vld [vmem:[#allocation5 + $0x90] sm:$0xff]
          %v1537 = vld [vmem:[#allocation5 + $0x98] sm:$0xff]
          %v1538 = vld [vmem:[#allocation5 + $0xa0] sm:$0xff]
          %v1539 = vld [vmem:[#allocation5 + $0xa8] sm:$0xff]
          %v1540 = vld [vmem:[#allocation5 + $0xb0] sm:$0xff]
          %v1541 = vld [vmem:[#allocation5 + $0xb8] sm:$0xff]
          %v1542 = vld [vmem:[#allocation5 + $0xc0] sm:$0xff]
          %v1543 = vld [vmem:[#allocation5 + $0xc8] sm:$0xff]
          %v1544 = vld [vmem:[#allocation5 + $0xd0] sm:$0xff]
          %v1545 = vld [vmem:[#allocation5 + $0xd8] sm:$0xff]
          %v1546 = vld [vmem:[#allocation5 + $0xe0] sm:$0xff]
          %v1547 = vld [vmem:[#allocation5 + $0xe8] sm:$0xff]
          %v1548 = vld [vmem:[#allocation5 + $0xf0] sm:$0xff]
          %v1549 = vld [vmem:[#allocation5 + $0xf8] sm:$0xff]
          %v1550 = vld [vmem:[#allocation5 + $0x100] sm:$0xff]
          %v1551 = vld [vmem:[#allocation5 + $0x108] sm:$0xff]
          %v1552 = vld [vmem:[#allocation5 + $0x110] sm:$0xff]
          %v1553 = vld [vmem:[#allocation5 + $0x118] sm:$0xff]
          %v1554 = vld [vmem:[#allocation5 + $0x120] sm:$0xff]
          %v1555 = vld [vmem:[#allocation5 + $0x128] sm:$0xff]
          %v1556 = vld [vmem:[#allocation5 + $0x130] sm:$0xff]
          %v1557 = vld [vmem:[#allocation5 + $0x138] sm:$0xff]
          %v1558 = vld [vmem:[#allocation5 + $0x140] sm:$0xff]
          %v1559 = vld [vmem:[#allocation5 + $0x148] sm:$0xff]
          %v1560 = vld [vmem:[#allocation5 + $0x150] sm:$0xff]
          %v1561 = vld [vmem:[#allocation5 + $0x158] sm:$0xff]
          %v1562 = vld [vmem:[#allocation5 + $0x160] sm:$0xff]
          %v1563 = vld [vmem:[#allocation5 + $0x168] sm:$0xff]
          %v1564 = vld [vmem:[#allocation5 + $0x170] sm:$0xff]
          %v1565 = vld [vmem:[#allocation5 + $0x178] sm:$0xff]
          %v1566 = vld [vmem:[#allocation5 + $0x180] sm:$0xff]
          %v1567 = vld [vmem:[#allocation5 + $0x188] sm:$0xff]
          %v1568 = vld [vmem:[#allocation5 + $0x190] sm:$0xff]
          %v1569 = vld [vmem:[#allocation5 + $0x198] sm:$0xff]
          %v1570 = vld [vmem:[#allocation5 + $0x1a0] sm:$0xff]
          %v1571 = vld [vmem:[#allocation5 + $0x1a8] sm:$0xff]
          %v1572 = vld [vmem:[#allocation5 + $0x1b0] sm:$0xff]
          %v1573 = vld [vmem:[#allocation5 + $0x1b8] sm:$0xff]
          %v1574 = vld [vmem:[#allocation5 + $0x1c0] sm:$0xff]
          %v1575 = vld [vmem:[#allocation5 + $0x1c8] sm:$0xff]
          %v1576 = vld [vmem:[#allocation5 + $0x1d0] sm:$0xff]
          %v1577 = vld [vmem:[#allocation5 + $0x1d8] sm:$0xff]
          %v1578 = vld [vmem:[#allocation5 + $0x1e0] sm:$0xff]
          %v1579 = vld [vmem:[#allocation5 + $0x1e8] sm:$0xff]
          %v1580 = vld [vmem:[#allocation5 + $0x1f0] sm:$0xff]
          %v1581 = vld [vmem:[#allocation5 + $0x1f8] sm:$0xff]
          %v1582 = vld [vmem:[#allocation5 + $0x200] sm:$0xff]
          %v1583 = vld [vmem:[#allocation5 + $0x208] sm:$0xff]
          %v1584 = vld [vmem:[#allocation5 + $0x210] sm:$0xff]
          %v1585 = vld [vmem:[#allocation5 + $0x218] sm:$0xff]
          %v1586 = vld [vmem:[#allocation5 + $0x220] sm:$0xff]
          %v1587 = vld [vmem:[#allocation5 + $0x228] sm:$0xff]
          %v1588 = vld [vmem:[#allocation5 + $0x230] sm:$0xff]
          %v1589 = vld [vmem:[#allocation5 + $0x238] sm:$0xff]
          %v1590 = vld [vmem:[#allocation5 + $0x240] sm:$0xff]
          %v1591 = vld [vmem:[#allocation5 + $0x248] sm:$0xff]
          %v1592 = vld [vmem:[#allocation5 + $0x250] sm:$0xff]
          %v1593 = vld [vmem:[#allocation5 + $0x258] sm:$0xff]
          %v1594 = vld [vmem:[#allocation5 + $0x260] sm:$0xff]
          %v1595 = vld [vmem:[#allocation5 + $0x268] sm:$0xff]
          %v1596 = vld [vmem:[#allocation5 + $0x270] sm:$0xff]
          %v1597 = vld [vmem:[#allocation5 + $0x278] sm:$0xff]
          %v1598 = vld [vmem:[#allocation5 + $0x280] sm:$0xff]
          %v1599 = vld [vmem:[#allocation5 + $0x288] sm:$0xff]
          %v1600 = vld [vmem:[#allocation5 + $0x290] sm:$0xff]
          %v1601 = vld [vmem:[#allocation5 + $0x298] sm:$0xff]
          %v1602 = vld [vmem:[#allocation5 + $0x2a0] sm:$0xff]
          %v1603 = vld [vmem:[#allocation5 + $0x2a8] sm:$0xff]
          %v1604 = vld [vmem:[#allocation5 + $0x2b0] sm:$0xff]
          %v1605 = vld [vmem:[#allocation5 + $0x2b8] sm:$0xff]
          %v1606 = vld [vmem:[#allocation5 + $0x2c0] sm:$0xff]
          %v1607 = vld [vmem:[#allocation5 + $0x2c8] sm:$0xff]
          %v1608 = vld [vmem:[#allocation5 + $0x2d0] sm:$0xff]
          %v1609 = vld [vmem:[#allocation5 + $0x2d8] sm:$0xff]
          %v1610 = vld [vmem:[#allocation5 + $0x2e0] sm:$0xff]
          %v1611 = vld [vmem:[#allocation5 + $0x2e8] sm:$0xff]
          %v1612 = vld [vmem:[#allocation5 + $0x2f0] sm:$0xff]
          %v1613 = vld [vmem:[#allocation5 + $0x2f8] sm:$0xff]
          %v1614 = vld [vmem:[#allocation5 + $0x300] sm:$0xff]
          %v1615 = vld [vmem:[#allocation5 + $0x308] sm:$0xff]
          %v1616 = vld [vmem:[#allocation5 + $0x310] sm:$0xff]
          %v1617 = vld [vmem:[#allocation5 + $0x318] sm:$0xff]
          %v1618 = vld [vmem:[#allocation5 + $0x320] sm:$0xff]
          %v1619 = vld [vmem:[#allocation5 + $0x328] sm:$0xff]
          %v1620 = vld [vmem:[#allocation5 + $0x330] sm:$0xff]
          %v1621 = vld [vmem:[#allocation5 + $0x338] sm:$0xff]
          %v1622 = vld [vmem:[#allocation5 + $0x340] sm:$0xff]
          %v1623 = vld [vmem:[#allocation5 + $0x348] sm:$0xff]
          %v1624 = vld [vmem:[#allocation5 + $0x350] sm:$0xff]
          %v1625 = vld [vmem:[#allocation5 + $0x358] sm:$0xff]
          %v1626 = vld [vmem:[#allocation5 + $0x360] sm:$0xff]
          %v1627 = vld [vmem:[#allocation5 + $0x368] sm:$0xff]
          %v1628 = vld [vmem:[#allocation5 + $0x370] sm:$0xff]
          %v1629 = vld [vmem:[#allocation5 + $0x378] sm:$0xff]
          %v1630 = vld [vmem:[#allocation5 + $0x380] sm:$0xff]
          %v1631 = vld [vmem:[#allocation5 + $0x388] sm:$0xff]
          %v1632 = vld [vmem:[#allocation5 + $0x390] sm:$0xff]
          %v1633 = vld [vmem:[#allocation5 + $0x398] sm:$0xff]
          %v1634 = vld [vmem:[#allocation5 + $0x3a0] sm:$0xff]
          %v1635 = vld [vmem:[#allocation5 + $0x3a8] sm:$0xff]
          %v1636 = vld [vmem:[#allocation5 + $0x3b0] sm:$0xff]
          %v1637 = vld [vmem:[#allocation5 + $0x3b8] sm:$0xff]
          %v1638 = vld [vmem:[#allocation5 + $0x3c0] sm:$0xff]
          %v1639 = vld [vmem:[#allocation5 + $0x3c8] sm:$0xff]
          %v1640 = vld [vmem:[#allocation5 + $0x3d0] sm:$0xff]
          %v1641 = vld [vmem:[#allocation5 + $0x3d8] sm:$0xff]
          %v1642 = vld [vmem:[#allocation5 + $0x3e0] sm:$0xff]
          %v1643 = vld [vmem:[#allocation5 + $0x3e8] sm:$0xff]
          %v1644 = vld [vmem:[#allocation5 + $0x3f0] sm:$0xff]
          %v1645 = vld [vmem:[#allocation5 + $0x3f8] sm:$0xff]
          %v1646 = vld [vmem:[%s4] sm:$0xf]
          %v1648 = vlaneseq
          %v1649 = vshrl.u32 %v1648, 7
          %v1650 = vsub.s32 0, %v1649
          %v1651 = vrot.slane %v1646, %v1650
          %v1652 = vlaneseq
          %v1653 = vshrl.u32 %v1652, 7
          %v1654 = vsub.s32 1, %v1653
          %v1655 = vrot.slane %v1646, %v1654
          %v1656 = vlaneseq
          %v1657 = vshrl.u32 %v1656, 7
          %v1658 = vsub.s32 2, %v1657
          %v1659 = vrot.slane %v1646, %v1658
          %v1660 = vlaneseq
          %v1661 = vshrl.u32 %v1660, 7
          %v1662 = vsub.s32 3, %v1661
          %v1663 = vrot.slane %v1646, %v1662
          %v1796 = vunpack.c.l.b16 %v1518
          %v1797 = vunpack.c.h.b16 %v1518
          %v1798 = vunpack.c.l.b16 %v1519
          %v1799 = vunpack.c.h.b16 %v1519
          %v1800 = vunpack.c.l.b16 %v1520
          %v1801 = vunpack.c.h.b16 %v1520
          %v1802 = vunpack.c.l.b16 %v1521
          %v1803 = vunpack.c.h.b16 %v1521
          %v1804 = vunpack.c.l.b16 %v1522
          %v1805 = vunpack.c.h.b16 %v1522
          %v1806 = vunpack.c.l.b16 %v1523
          %v1807 = vunpack.c.h.b16 %v1523
          %v1808 = vunpack.c.l.b16 %v1524
          %v1809 = vunpack.c.h.b16 %v1524
          %v1810 = vunpack.c.l.b16 %v1525
          %v1811 = vunpack.c.h.b16 %v1525
          %v1812 = vunpack.c.l.b16 %v1526
          %v1813 = vunpack.c.h.b16 %v1526
          %v1814 = vunpack.c.l.b16 %v1527
          %v1815 = vunpack.c.h.b16 %v1527
          %v1816 = vunpack.c.l.b16 %v1528
          %v1817 = vunpack.c.h.b16 %v1528
          %v1818 = vunpack.c.l.b16 %v1529
          %v1819 = vunpack.c.h.b16 %v1529
          %v1820 = vunpack.c.l.b16 %v1530
          %v1821 = vunpack.c.h.b16 %v1530
          %v1822 = vunpack.c.l.b16 %v1531
          %v1823 = vunpack.c.h.b16 %v1531
          %v1824 = vunpack.c.l.b16 %v1532
          %v1825 = vunpack.c.h.b16 %v1532
          %v1826 = vunpack.c.l.b16 %v1533
          %v1827 = vunpack.c.h.b16 %v1533
          %v1828 = vunpack.c.l.b16 %v1534
          %v1829 = vunpack.c.h.b16 %v1534
          %v1830 = vunpack.c.l.b16 %v1535
          %v1831 = vunpack.c.h.b16 %v1535
          %v1832 = vunpack.c.l.b16 %v1536
          %v1833 = vunpack.c.h.b16 %v1536
          %v1834 = vunpack.c.l.b16 %v1537
          %v1835 = vunpack.c.h.b16 %v1537
          %v1836 = vunpack.c.l.b16 %v1538
          %v1837 = vunpack.c.h.b16 %v1538
          %v1838 = vunpack.c.l.b16 %v1539
          %v1839 = vunpack.c.h.b16 %v1539
          %v1840 = vunpack.c.l.b16 %v1540
          %v1841 = vunpack.c.h.b16 %v1540
          %v1842 = vunpack.c.l.b16 %v1541
          %v1843 = vunpack.c.h.b16 %v1541
          %v1844 = vunpack.c.l.b16 %v1542
          %v1845 = vunpack.c.h.b16 %v1542
          %v1846 = vunpack.c.l.b16 %v1543
          %v1847 = vunpack.c.h.b16 %v1543
          %v1848 = vunpack.c.l.b16 %v1544
          %v1849 = vunpack.c.h.b16 %v1544
          %v1850 = vunpack.c.l.b16 %v1545
          %v1851 = vunpack.c.h.b16 %v1545
          %v1852 = vunpack.c.l.b16 %v1546
          %v1853 = vunpack.c.h.b16 %v1546
          %v1854 = vunpack.c.l.b16 %v1547
          %v1855 = vunpack.c.h.b16 %v1547
          %v1856 = vunpack.c.l.b16 %v1548
          %v1857 = vunpack.c.h.b16 %v1548
          %v1858 = vunpack.c.l.b16 %v1549
          %v1859 = vunpack.c.h.b16 %v1549
          %v1860 = vunpack.c.l.b16 %v1550
          %v1861 = vunpack.c.h.b16 %v1550
          %v1862 = vunpack.c.l.b16 %v1551
          %v1863 = vunpack.c.h.b16 %v1551
          %v1864 = vunpack.c.l.b16 %v1552
          %v1865 = vunpack.c.h.b16 %v1552
          %v1866 = vunpack.c.l.b16 %v1553
          %v1867 = vunpack.c.h.b16 %v1553
          %v1868 = vunpack.c.l.b16 %v1554
          %v1869 = vunpack.c.h.b16 %v1554
          %v1870 = vunpack.c.l.b16 %v1555
          %v1871 = vunpack.c.h.b16 %v1555
          %v1872 = vunpack.c.l.b16 %v1556
          %v1873 = vunpack.c.h.b16 %v1556
          %v1874 = vunpack.c.l.b16 %v1557
          %v1875 = vunpack.c.h.b16 %v1557
          %v1876 = vunpack.c.l.b16 %v1558
          %v1877 = vunpack.c.h.b16 %v1558
          %v1878 = vunpack.c.l.b16 %v1559
          %v1879 = vunpack.c.h.b16 %v1559
          %v1880 = vunpack.c.l.b16 %v1560
          %v1881 = vunpack.c.h.b16 %v1560
          %v1882 = vunpack.c.l.b16 %v1561
          %v1883 = vunpack.c.h.b16 %v1561
          %v1884 = vunpack.c.l.b16 %v1562
          %v1885 = vunpack.c.h.b16 %v1562
          %v1886 = vunpack.c.l.b16 %v1563
          %v1887 = vunpack.c.h.b16 %v1563
          %v1888 = vunpack.c.l.b16 %v1564
          %v1889 = vunpack.c.h.b16 %v1564
          %v1890 = vunpack.c.l.b16 %v1565
          %v1891 = vunpack.c.h.b16 %v1565
          %v1892 = vunpack.c.l.b16 %v1566
          %v1893 = vunpack.c.h.b16 %v1566
          %v1894 = vunpack.c.l.b16 %v1567
          %v1895 = vunpack.c.h.b16 %v1567
          %v1896 = vunpack.c.l.b16 %v1568
          %v1897 = vunpack.c.h.b16 %v1568
          %v1898 = vunpack.c.l.b16 %v1569
          %v1899 = vunpack.c.h.b16 %v1569
          %v1900 = vunpack.c.l.b16 %v1570
          %v1901 = vunpack.c.h.b16 %v1570
          %v1902 = vunpack.c.l.b16 %v1571
          %v1903 = vunpack.c.h.b16 %v1571
          %v1904 = vunpack.c.l.b16 %v1572
          %v1905 = vunpack.c.h.b16 %v1572
          %v1906 = vunpack.c.l.b16 %v1573
          %v1907 = vunpack.c.h.b16 %v1573
          %v1908 = vunpack.c.l.b16 %v1574
          %v1909 = vunpack.c.h.b16 %v1574
          %v1910 = vunpack.c.l.b16 %v1575
          %v1911 = vunpack.c.h.b16 %v1575
          %v1912 = vunpack.c.l.b16 %v1576
          %v1913 = vunpack.c.h.b16 %v1576
          %v1914 = vunpack.c.l.b16 %v1577
          %v1915 = vunpack.c.h.b16 %v1577
          %v1916 = vunpack.c.l.b16 %v1578
          %v1917 = vunpack.c.h.b16 %v1578
          %v1918 = vunpack.c.l.b16 %v1579
          %v1919 = vunpack.c.h.b16 %v1579
          %v1920 = vunpack.c.l.b16 %v1580
          %v1921 = vunpack.c.h.b16 %v1580
          %v1922 = vunpack.c.l.b16 %v1581
          %v1923 = vunpack.c.h.b16 %v1581
          %v1924 = vunpack.c.l.b16 %v1582
          %v1925 = vunpack.c.h.b16 %v1582
          %v1926 = vunpack.c.l.b16 %v1583
          %v1927 = vunpack.c.h.b16 %v1583
          %v1928 = vunpack.c.l.b16 %v1584
          %v1929 = vunpack.c.h.b16 %v1584
          %v1930 = vunpack.c.l.b16 %v1585
          %v1931 = vunpack.c.h.b16 %v1585
          %v1932 = vunpack.c.l.b16 %v1586
          %v1933 = vunpack.c.h.b16 %v1586
          %v1934 = vunpack.c.l.b16 %v1587
          %v1935 = vunpack.c.h.b16 %v1587
          %v1936 = vunpack.c.l.b16 %v1588
          %v1937 = vunpack.c.h.b16 %v1588
          %v1938 = vunpack.c.l.b16 %v1589
          %v1939 = vunpack.c.h.b16 %v1589
          %v1940 = vunpack.c.l.b16 %v1590
          %v1941 = vunpack.c.h.b16 %v1590
          %v1942 = vunpack.c.l.b16 %v1591
          %v1943 = vunpack.c.h.b16 %v1591
          %v1944 = vunpack.c.l.b16 %v1592
          %v1945 = vunpack.c.h.b16 %v1592
          %v1946 = vunpack.c.l.b16 %v1593
          %v1947 = vunpack.c.h.b16 %v1593
          %v1948 = vunpack.c.l.b16 %v1594
          %v1949 = vunpack.c.h.b16 %v1594
          %v1950 = vunpack.c.l.b16 %v1595
          %v1951 = vunpack.c.h.b16 %v1595
          %v1952 = vunpack.c.l.b16 %v1596
          %v1953 = vunpack.c.h.b16 %v1596
          %v1954 = vunpack.c.l.b16 %v1597
          %v1955 = vunpack.c.h.b16 %v1597
          %v1956 = vunpack.c.l.b16 %v1598
          %v1957 = vunpack.c.h.b16 %v1598
          %v1958 = vunpack.c.l.b16 %v1599
          %v1959 = vunpack.c.h.b16 %v1599
          %v1960 = vunpack.c.l.b16 %v1600
          %v1961 = vunpack.c.h.b16 %v1600
          %v1962 = vunpack.c.l.b16 %v1601
          %v1963 = vunpack.c.h.b16 %v1601
          %v1964 = vunpack.c.l.b16 %v1602
          %v1965 = vunpack.c.h.b16 %v1602
          %v1966 = vunpack.c.l.b16 %v1603
          %v1967 = vunpack.c.h.b16 %v1603
          %v1968 = vunpack.c.l.b16 %v1604
          %v1969 = vunpack.c.h.b16 %v1604
          %v1970 = vunpack.c.l.b16 %v1605
          %v1971 = vunpack.c.h.b16 %v1605
          %v1972 = vunpack.c.l.b16 %v1606
          %v1973 = vunpack.c.h.b16 %v1606
          %v1974 = vunpack.c.l.b16 %v1607
          %v1975 = vunpack.c.h.b16 %v1607
          %v1976 = vunpack.c.l.b16 %v1608
          %v1977 = vunpack.c.h.b16 %v1608
          %v1978 = vunpack.c.l.b16 %v1609
          %v1979 = vunpack.c.h.b16 %v1609
          %v1980 = vunpack.c.l.b16 %v1610
          %v1981 = vunpack.c.h.b16 %v1610
          %v1982 = vunpack.c.l.b16 %v1611
          %v1983 = vunpack.c.h.b16 %v1611
          %v1984 = vunpack.c.l.b16 %v1612
          %v1985 = vunpack.c.h.b16 %v1612
          %v1986 = vunpack.c.l.b16 %v1613
          %v1987 = vunpack.c.h.b16 %v1613
          %v1988 = vunpack.c.l.b16 %v1614
          %v1989 = vunpack.c.h.b16 %v1614
          %v1990 = vunpack.c.l.b16 %v1615
          %v1991 = vunpack.c.h.b16 %v1615
          %v1992 = vunpack.c.l.b16 %v1616
          %v1993 = vunpack.c.h.b16 %v1616
          %v1994 = vunpack.c.l.b16 %v1617
          %v1995 = vunpack.c.h.b16 %v1617
          %v1996 = vunpack.c.l.b16 %v1618
          %v1997 = vunpack.c.h.b16 %v1618
          %v1998 = vunpack.c.l.b16 %v1619
          %v1999 = vunpack.c.h.b16 %v1619
          %v2000 = vunpack.c.l.b16 %v1620
          %v2001 = vunpack.c.h.b16 %v1620
          %v2002 = vunpack.c.l.b16 %v1621
          %v2003 = vunpack.c.h.b16 %v1621
          %v2004 = vunpack.c.l.b16 %v1622
          %v2005 = vunpack.c.h.b16 %v1622
          %v2006 = vunpack.c.l.b16 %v1623
          %v2007 = vunpack.c.h.b16 %v1623
          %v2008 = vunpack.c.l.b16 %v1624
          %v2009 = vunpack.c.h.b16 %v1624
          %v2010 = vunpack.c.l.b16 %v1625
          %v2011 = vunpack.c.h.b16 %v1625
          %v2012 = vunpack.c.l.b16 %v1626
          %v2013 = vunpack.c.h.b16 %v1626
          %v2014 = vunpack.c.l.b16 %v1627
          %v2015 = vunpack.c.h.b16 %v1627
          %v2016 = vunpack.c.l.b16 %v1628
          %v2017 = vunpack.c.h.b16 %v1628
          %v2018 = vunpack.c.l.b16 %v1629
          %v2019 = vunpack.c.h.b16 %v1629
          %v2020 = vunpack.c.l.b16 %v1630
          %v2021 = vunpack.c.h.b16 %v1630
          %v2022 = vunpack.c.l.b16 %v1631
          %v2023 = vunpack.c.h.b16 %v1631
          %v2024 = vunpack.c.l.b16 %v1632
          %v2025 = vunpack.c.h.b16 %v1632
          %v2026 = vunpack.c.l.b16 %v1633
          %v2027 = vunpack.c.h.b16 %v1633
          %v2028 = vunpack.c.l.b16 %v1634
          %v2029 = vunpack.c.h.b16 %v1634
          %v2030 = vunpack.c.l.b16 %v1635
          %v2031 = vunpack.c.h.b16 %v1635
          %v2032 = vunpack.c.l.b16 %v1636
          %v2033 = vunpack.c.h.b16 %v1636
          %v2034 = vunpack.c.l.b16 %v1637
          %v2035 = vunpack.c.h.b16 %v1637
          %v2036 = vunpack.c.l.b16 %v1638
          %v2037 = vunpack.c.h.b16 %v1638
          %v2038 = vunpack.c.l.b16 %v1639
          %v2039 = vunpack.c.h.b16 %v1639
          %v2040 = vunpack.c.l.b16 %v1640
          %v2041 = vunpack.c.h.b16 %v1640
          %v2042 = vunpack.c.l.b16 %v1641
          %v2043 = vunpack.c.h.b16 %v1641
          %v2044 = vunpack.c.l.b16 %v1642
          %v2045 = vunpack.c.h.b16 %v1642
          %v2046 = vunpack.c.l.b16 %v1643
          %v2047 = vunpack.c.h.b16 %v1643
          %v2048 = vunpack.c.l.b16 %v1644
          %v2049 = vunpack.c.h.b16 %v1644
          %v2050 = vunpack.c.l.b16 %v1645
          %v2051 = vunpack.c.h.b16 %v1645
          %v2052 = vpack.c.b16 %v1800, %v1796
          %v2053 = vpack.c.b16 %v1801, %v1797
          %v2054 = vpack.c.b16 %v1802, %v1798
          %v2055 = vpack.c.b16 %v1803, %v1799
          %v2056 = vpack.c.b16 %v1808, %v1804
          %v2057 = vpack.c.b16 %v1809, %v1805
          %v2058 = vpack.c.b16 %v1810, %v1806
          %v2059 = vpack.c.b16 %v1811, %v1807
          %v2060 = vpack.c.b16 %v1816, %v1812
          %v2061 = vpack.c.b16 %v1817, %v1813
          %v2062 = vpack.c.b16 %v1818, %v1814
          %v2063 = vpack.c.b16 %v1819, %v1815
          %v2064 = vpack.c.b16 %v1824, %v1820
          %v2065 = vpack.c.b16 %v1825, %v1821
          %v2066 = vpack.c.b16 %v1826, %v1822
          %v2067 = vpack.c.b16 %v1827, %v1823
          %v2068 = vpack.c.b16 %v1832, %v1828
          %v2069 = vpack.c.b16 %v1833, %v1829
          %v2070 = vpack.c.b16 %v1834, %v1830
          %v2071 = vpack.c.b16 %v1835, %v1831
          %v2072 = vpack.c.b16 %v1840, %v1836
          %v2073 = vpack.c.b16 %v1841, %v1837
          %v2074 = vpack.c.b16 %v1842, %v1838
          %v2075 = vpack.c.b16 %v1843, %v1839
          %v2076 = vpack.c.b16 %v1848, %v1844
          %v2077 = vpack.c.b16 %v1849, %v1845
          %v2078 = vpack.c.b16 %v1850, %v1846
          %v2079 = vpack.c.b16 %v1851, %v1847
          %v2080 = vpack.c.b16 %v1856, %v1852
          %v2081 = vpack.c.b16 %v1857, %v1853
          %v2082 = vpack.c.b16 %v1858, %v1854
          %v2083 = vpack.c.b16 %v1859, %v1855
          %v2084 = vpack.c.b16 %v1864, %v1860
          %v2085 = vpack.c.b16 %v1865, %v1861
          %v2086 = vpack.c.b16 %v1866, %v1862
          %v2087 = vpack.c.b16 %v1867, %v1863
          %v2088 = vpack.c.b16 %v1872, %v1868
          %v2089 = vpack.c.b16 %v1873, %v1869
          %v2090 = vpack.c.b16 %v1874, %v1870
          %v2091 = vpack.c.b16 %v1875, %v1871
          %v2092 = vpack.c.b16 %v1880, %v1876
          %v2093 = vpack.c.b16 %v1881, %v1877
          %v2094 = vpack.c.b16 %v1882, %v1878
          %v2095 = vpack.c.b16 %v1883, %v1879
          %v2096 = vpack.c.b16 %v1888, %v1884
          %v2097 = vpack.c.b16 %v1889, %v1885
          %v2098 = vpack.c.b16 %v1890, %v1886
          %v2099 = vpack.c.b16 %v1891, %v1887
          %v2100 = vpack.c.b16 %v1896, %v1892
          %v2101 = vpack.c.b16 %v1897, %v1893
          %v2102 = vpack.c.b16 %v1898, %v1894
          %v2103 = vpack.c.b16 %v1899, %v1895
          %v2104 = vpack.c.b16 %v1904, %v1900
          %v2105 = vpack.c.b16 %v1905, %v1901
          %v2106 = vpack.c.b16 %v1906, %v1902
          %v2107 = vpack.c.b16 %v1907, %v1903
          %v2108 = vpack.c.b16 %v1912, %v1908
          %v2109 = vpack.c.b16 %v1913, %v1909
          %v2110 = vpack.c.b16 %v1914, %v1910
          %v2111 = vpack.c.b16 %v1915, %v1911
          %v2112 = vpack.c.b16 %v1920, %v1916
          %v2113 = vpack.c.b16 %v1921, %v1917
          %v2114 = vpack.c.b16 %v1922, %v1918
          %v2115 = vpack.c.b16 %v1923, %v1919
          %v2116 = vpack.c.b16 %v1928, %v1924
          %v2117 = vpack.c.b16 %v1929, %v1925
          %v2118 = vpack.c.b16 %v1930, %v1926
          %v2119 = vpack.c.b16 %v1931, %v1927
          %v2120 = vpack.c.b16 %v1936, %v1932
          %v2121 = vpack.c.b16 %v1937, %v1933
          %v2122 = vpack.c.b16 %v1938, %v1934
          %v2123 = vpack.c.b16 %v1939, %v1935
          %v2124 = vpack.c.b16 %v1944, %v1940
          %v2125 = vpack.c.b16 %v1945, %v1941
          %v2126 = vpack.c.b16 %v1946, %v1942
          %v2127 = vpack.c.b16 %v1947, %v1943
          %v2128 = vpack.c.b16 %v1952, %v1948
          %v2129 = vpack.c.b16 %v1953, %v1949
          %v2130 = vpack.c.b16 %v1954, %v1950
          %v2131 = vpack.c.b16 %v1955, %v1951
          %v2132 = vpack.c.b16 %v1960, %v1956
          %v2133 = vpack.c.b16 %v1961, %v1957
          %v2134 = vpack.c.b16 %v1962, %v1958
          %v2135 = vpack.c.b16 %v1963, %v1959
          %v2136 = vpack.c.b16 %v1968, %v1964
          %v2137 = vpack.c.b16 %v1969, %v1965
          %v2138 = vpack.c.b16 %v1970, %v1966
          %v2139 = vpack.c.b16 %v1971, %v1967
          %v2140 = vpack.c.b16 %v1976, %v1972
          %v2141 = vpack.c.b16 %v1977, %v1973
          %v2142 = vpack.c.b16 %v1978, %v1974
          %v2143 = vpack.c.b16 %v1979, %v1975
          %v2144 = vpack.c.b16 %v1984, %v1980
          %v2145 = vpack.c.b16 %v1985, %v1981
          %v2146 = vpack.c.b16 %v1986, %v1982
          %v2147 = vpack.c.b16 %v1987, %v1983
          %v2148 = vpack.c.b16 %v1992, %v1988
          %v2149 = vpack.c.b16 %v1993, %v1989
          %v2150 = vpack.c.b16 %v1994, %v1990
          %v2151 = vpack.c.b16 %v1995, %v1991
          %v2152 = vpack.c.b16 %v2000, %v1996
          %v2153 = vpack.c.b16 %v2001, %v1997
          %v2154 = vpack.c.b16 %v2002, %v1998
          %v2155 = vpack.c.b16 %v2003, %v1999
          %v2156 = vpack.c.b16 %v2008, %v2004
          %v2157 = vpack.c.b16 %v2009, %v2005
          %v2158 = vpack.c.b16 %v2010, %v2006
          %v2159 = vpack.c.b16 %v2011, %v2007
          %v2160 = vpack.c.b16 %v2016, %v2012
          %v2161 = vpack.c.b16 %v2017, %v2013
          %v2162 = vpack.c.b16 %v2018, %v2014
          %v2163 = vpack.c.b16 %v2019, %v2015
          %v2164 = vpack.c.b16 %v2024, %v2020
          %v2165 = vpack.c.b16 %v2025, %v2021
          %v2166 = vpack.c.b16 %v2026, %v2022
          %v2167 = vpack.c.b16 %v2027, %v2023
          %v2168 = vpack.c.b16 %v2032, %v2028
          %v2169 = vpack.c.b16 %v2033, %v2029
          %v2170 = vpack.c.b16 %v2034, %v2030
          %v2171 = vpack.c.b16 %v2035, %v2031
          %v2172 = vpack.c.b16 %v2040, %v2036
          %v2173 = vpack.c.b16 %v2041, %v2037
          %v2174 = vpack.c.b16 %v2042, %v2038
          %v2175 = vpack.c.b16 %v2043, %v2039
          %v2176 = vpack.c.b16 %v2048, %v2044
          %v2177 = vpack.c.b16 %v2049, %v2045
          %v2178 = vpack.c.b16 %v2050, %v2046
          %v2179 = vpack.c.b16 %v2051, %v2047
          %2308 = vmatprep.subr.bf16.mxu0 %v2053
          %2309 = vmatpush1.bf16.msra.mxu0 %v2052
          %2310 = vmatprep.subr.bf16.mxu0 %v2057
          %2311 = vmatpush1.bf16.msra.mxu0 %v2056
          %2312 = vmatprep.subr.bf16.mxu0 %v2061
          %2313 = vmatpush1.bf16.msra.mxu0 %v2060
          %2314 = vmatprep.subr.bf16.mxu0 %v2065
          %2315 = vmatpush1.bf16.msra.mxu0 %v2064
          %2316 = vmatprep.subr.bf16.mxu0 %v2069
          %2317 = vmatpush1.bf16.msra.mxu0 %v2068
          %2318 = vmatprep.subr.bf16.mxu0 %v2073
          %2319 = vmatpush1.bf16.msra.mxu0 %v2072
          %2320 = vmatprep.subr.bf16.mxu0 %v2077
          %2321 = vmatpush1.bf16.msra.mxu0 %v2076
          %2322 = vmatprep.subr.bf16.mxu0 %v2081
          %2323 = vmatpush1.bf16.msra.mxu0 %v2080
          %2324 = vmatprep.subr.bf16.mxu0 %v2085
          %2325 = vmatpush1.bf16.msra.mxu0 %v2084
          %2326 = vmatprep.subr.bf16.mxu0 %v2089
          %2327 = vmatpush1.bf16.msra.mxu0 %v2088
          %2328 = vmatprep.subr.bf16.mxu0 %v2093
          %2329 = vmatpush1.bf16.msra.mxu0 %v2092
          %2330 = vmatprep.subr.bf16.mxu0 %v2097
          %2331 = vmatpush1.bf16.msra.mxu0 %v2096
          %2332 = vmatprep.subr.bf16.mxu0 %v2101
          %2333 = vmatpush1.bf16.msra.mxu0 %v2100
          %2334 = vmatprep.subr.bf16.mxu0 %v2105
          %2335 = vmatpush1.bf16.msra.mxu0 %v2104
          %2336 = vmatprep.subr.bf16.mxu0 %v2109
          %2337 = vmatpush1.bf16.msra.mxu0 %v2108
          %2338 = vmatprep.subr.bf16.mxu0 %v2113
          %2339 = vmatpush1.bf16.msra.mxu0 %v2112
          %2340 = vmatprep.mubr.bf16.mxu0 %v1515
          %2341 = vmatmul.mubr.bf16.gmra.mrb[0].mxu0 %v1514
          %v2342 = vpop.f32.mrb[0].mxu0
          %v2343 = vadd.f32 %v1651, %v2342
          %v2344 = vpop.f32.mrb[0].mxu0
          %v2345 = vadd.f32 %v1655, %v2344
          %v2346 = vpop.f32.mrb[0].mxu0
          %v2347 = vpop.f32.mrb[0].mxu0
          %2348 = vdwg.mxu0
          %2349 = vmatprep.subr.bf16.mxu0 %v2117
          %2350 = vmatpush1.bf16.msra.mxu0 %v2116
          %2351 = vmatprep.subr.bf16.mxu0 %v2121
          %2352 = vmatpush1.bf16.msra.mxu0 %v2120
          %2353 = vmatprep.subr.bf16.mxu0 %v2125
          %2354 = vmatpush1.bf16.msra.mxu0 %v2124
          %2355 = vmatprep.subr.bf16.mxu0 %v2129
          %2356 = vmatpush1.bf16.msra.mxu0 %v2128
          %2357 = vmatprep.subr.bf16.mxu0 %v2133
          %2358 = vmatpush1.bf16.msra.mxu0 %v2132
          %2359 = vmatprep.subr.bf16.mxu0 %v2137
          %2360 = vmatpush1.bf16.msra.mxu0 %v2136
          %2361 = vmatprep.subr.bf16.mxu0 %v2141
          %2362 = vmatpush1.bf16.msra.mxu0 %v2140
          %2363 = vmatprep.subr.bf16.mxu0 %v2145
          %2364 = vmatpush1.bf16.msra.mxu0 %v2144
          %2365 = vmatprep.subr.bf16.mxu0 %v2149
          %2366 = vmatpush1.bf16.msra.mxu0 %v2148
          %2367 = vmatprep.subr.bf16.mxu0 %v2153
          %2368 = vmatpush1.bf16.msra.mxu0 %v2152
          %2369 = vmatprep.subr.bf16.mxu0 %v2157
          %2370 = vmatpush1.bf16.msra.mxu0 %v2156
          %2371 = vmatprep.subr.bf16.mxu0 %v2161
          %2372 = vmatpush1.bf16.msra.mxu0 %v2160
          %2373 = vmatprep.subr.bf16.mxu0 %v2165
          %2374 = vmatpush1.bf16.msra.mxu0 %v2164
          %2375 = vmatprep.subr.bf16.mxu0 %v2169
          %2376 = vmatpush1.bf16.msra.mxu0 %v2168
          %2377 = vmatprep.subr.bf16.mxu0 %v2173
          %2378 = vmatpush1.bf16.msra.mxu0 %v2172
          %2379 = vmatprep.subr.bf16.mxu0 %v2177
          %2380 = vmatpush1.bf16.msra.mxu0 %v2176
          %2381 = vmatprep.mubr.bf16.mxu0 %v1517
          %2382 = vmatmul.mubr.bf16.gmra.mrb[0].mxu0 %v1516
          %v2383 = vpop.f32.mrb[0].mxu0
          %v2384 = vadd.f32 %v2343, %v2383
          %v2385 = vpop.f32.mrb[0].mxu0
          %v2386 = vadd.f32 %v2345, %v2385
          %v2387 = vpop.f32.mrb[0].mxu0
          %v2388 = vpop.f32.mrb[0].mxu0
          %2389 = vdwg.mxu0
          %2390 = vmatprep.subr.bf16.mxu0 %v2055
          %2391 = vmatpush1.bf16.msra.mxu0 %v2054
          %2392 = vmatprep.subr.bf16.mxu0 %v2059
          %2393 = vmatpush1.bf16.msra.mxu0 %v2058
          %2394 = vmatprep.subr.bf16.mxu0 %v2063
          %2395 = vmatpush1.bf16.msra.mxu0 %v2062
          %2396 = vmatprep.subr.bf16.mxu0 %v2067
          %2397 = vmatpush1.bf16.msra.mxu0 %v2066
          %2398 = vmatprep.subr.bf16.mxu0 %v2071
          %2399 = vmatpush1.bf16.msra.mxu0 %v2070
          %2400 = vmatprep.subr.bf16.mxu0 %v2075
          %2401 = vmatpush1.bf16.msra.mxu0 %v2074
          %2402 = vmatprep.subr.bf16.mxu0 %v2079
          %2403 = vmatpush1.bf16.msra.mxu0 %v2078
          %2404 = vmatprep.subr.bf16.mxu0 %v2083
          %2405 = vmatpush1.bf16.msra.mxu0 %v2082
          %2406 = vmatprep.subr.bf16.mxu0 %v2087
          %2407 = vmatpush1.bf16.msra.mxu0 %v2086
          %2408 = vmatprep.subr.bf16.mxu0 %v2091
          %2409 = vmatpush1.bf16.msra.mxu0 %v2090
          %2410 = vmatprep.subr.bf16.mxu0 %v2095
          %2411 = vmatpush1.bf16.msra.mxu0 %v2094
          %2412 = vmatprep.subr.bf16.mxu0 %v2099
          %2413 = vmatpush1.bf16.msra.mxu0 %v2098
          %2414 = vmatprep.subr.bf16.mxu0 %v2103
          %2415 = vmatpush1.bf16.msra.mxu0 %v2102
          %2416 = vmatprep.subr.bf16.mxu0 %v2107
          %2417 = vmatpush1.bf16.msra.mxu0 %v2106
          %2418 = vmatprep.subr.bf16.mxu0 %v2111
          %2419 = vmatpush1.bf16.msra.mxu0 %v2110
          %2420 = vmatprep.subr.bf16.mxu0 %v2115
          %2421 = vmatpush1.bf16.msra.mxu0 %v2114
          %2422 = vmatprep.mubr.bf16.mxu0 %v1515
          %2423 = vmatmul.mubr.bf16.gmra.mrb[0].mxu0 %v1514
          %v2424 = vpop.f32.mrb[0].mxu0
          %v2425 = vadd.f32 %v1659, %v2424
          %v2426 = vpop.f32.mrb[0].mxu0
          %v2427 = vadd.f32 %v1663, %v2426
          %v2428 = vpop.f32.mrb[0].mxu0
          %v2429 = vpop.f32.mrb[0].mxu0
          %2430 = vdwg.mxu0
          %2431 = vmatprep.subr.bf16.mxu0 %v2119
          %2432 = vmatpush1.bf16.msra.mxu0 %v2118
          %2433 = vmatprep.subr.bf16.mxu0 %v2123
          %2434 = vmatpush1.bf16.msra.mxu0 %v2122
          %2435 = vmatprep.subr.bf16.mxu0 %v2127
          %2436 = vmatpush1.bf16.msra.mxu0 %v2126
          %2437 = vmatprep.subr.bf16.mxu0 %v2131
          %2438 = vmatpush1.bf16.msra.mxu0 %v2130
          %2439 = vmatprep.subr.bf16.mxu0 %v2135
          %2440 = vmatpush1.bf16.msra.mxu0 %v2134
          %2441 = vmatprep.subr.bf16.mxu0 %v2139
          %2442 = vmatpush1.bf16.msra.mxu0 %v2138
          %2443 = vmatprep.subr.bf16.mxu0 %v2143
          %2444 = vmatpush1.bf16.msra.mxu0 %v2142
          %2445 = vmatprep.subr.bf16.mxu0 %v2147
          %2446 = vmatpush1.bf16.msra.mxu0 %v2146
          %2447 = vmatprep.subr.bf16.mxu0 %v2151
          %2448 = vmatpush1.bf16.msra.mxu0 %v2150
          %2449 = vmatprep.subr.bf16.mxu0 %v2155
          %2450 = vmatpush1.bf16.msra.mxu0 %v2154
          %2451 = vmatprep.subr.bf16.mxu0 %v2159
          %2452 = vmatpush1.bf16.msra.mxu0 %v2158
          %2453 = vmatprep.subr.bf16.mxu0 %v2163
          %2454 = vmatpush1.bf16.msra.mxu0 %v2162
          %2455 = vmatprep.subr.bf16.mxu0 %v2167
          %2456 = vmatpush1.bf16.msra.mxu0 %v2166
          %2457 = vmatprep.subr.bf16.mxu0 %v2171
          %2458 = vmatpush1.bf16.msra.mxu0 %v2170
          %2459 = vmatprep.subr.bf16.mxu0 %v2175
          %2460 = vmatpush1.bf16.msra.mxu0 %v2174
          %2461 = vmatprep.subr.bf16.mxu0 %v2179
          %2462 = vmatpush1.bf16.msra.mxu0 %v2178
          %2463 = vmatprep.mubr.bf16.mxu0 %v1517
          %2464 = vmatmul.mubr.bf16.gmra.mrb[0].mxu0 %v1516
          %v2465 = vpop.f32.mrb[0].mxu0
          %v2466 = vadd.f32 %v2425, %v2465
          %v2467 = vpop.f32.mrb[0].mxu0
          %v2468 = vadd.f32 %v2427, %v2467
          %v2469 = vpop.f32.mrb[0].mxu0
          %v2470 = vpop.f32.mrb[0].mxu0
          %2471 = vdwg.mxu0
          %v2472 = vmax.f32 %v2384, 0.0
          %v2473 = vmax.f32 %v2386, 0.0
          %v2474 = vmax.f32 %v2466, 0.0
          %v2475 = vmax.f32 %v2468, 0.0
          %v2476 = vpack.c.bf16 %v2472, %v2472
          %v2477 = vpack.c.bf16 %v2473, %v2473
          %v2478 = vpack.c.bf16 %v2474, %v2474
          %v2479 = vpack.c.bf16 %v2475, %v2475
          %v2480 = vld [vmem:[#allocation7] sm:$0xff]
          %v2481 = vld [vmem:[#allocation7 + $0x8] sm:$0xff]
          %v2482 = vld [vmem:[#allocation7 + $0x10] sm:$0xff]
          %v2483 = vld [vmem:[#allocation7 + $0x18] sm:$0xff]
          %v2484 = vld [vmem:[#allocation7 + $0x20] sm:$0xff]
          %v2485 = vld [vmem:[#allocation7 + $0x28] sm:$0xff]
          %v2486 = vld [vmem:[#allocation7 + $0x30] sm:$0xff]
          %v2487 = vld [vmem:[#allocation7 + $0x38] sm:$0xff]
          %v2488 = vld [vmem:[#allocation7 + $0x40] sm:$0xff]
          %v2489 = vld [vmem:[#allocation7 + $0x48] sm:$0xff]
          %v2490 = vld [vmem:[#allocation7 + $0x50] sm:$0xff]
          %v2491 = vld [vmem:[#allocation7 + $0x58] sm:$0xff]
          %v2492 = vld [vmem:[#allocation7 + $0x60] sm:$0xff]
          %v2493 = vld [vmem:[#allocation7 + $0x68] sm:$0xff]
          %v2494 = vld [vmem:[#allocation7 + $0x70] sm:$0xff]
          %v2495 = vld [vmem:[#allocation7 + $0x78] sm:$0xff]
          %v2496 = vld [vmem:[#allocation7 + $0x80] sm:$0xff]
          %v2497 = vld [vmem:[#allocation7 + $0x88] sm:$0xff]
          %v2498 = vld [vmem:[#allocation7 + $0x90] sm:$0xff]
          %v2499 = vld [vmem:[#allocation7 + $0x98] sm:$0xff]
          %v2500 = vld [vmem:[#allocation7 + $0xa0] sm:$0xff]
          %v2501 = vld [vmem:[#allocation7 + $0xa8] sm:$0xff]
          %v2502 = vld [vmem:[#allocation7 + $0xb0] sm:$0xff]
          %v2503 = vld [vmem:[#allocation7 + $0xb8] sm:$0xff]
          %v2504 = vld [vmem:[#allocation7 + $0xc0] sm:$0xff]
          %v2505 = vld [vmem:[#allocation7 + $0xc8] sm:$0xff]
          %v2506 = vld [vmem:[#allocation7 + $0xd0] sm:$0xff]
          %v2507 = vld [vmem:[#allocation7 + $0xd8] sm:$0xff]
          %v2508 = vld [vmem:[#allocation7 + $0xe0] sm:$0xff]
          %v2509 = vld [vmem:[#allocation7 + $0xe8] sm:$0xff]
          %v2510 = vld [vmem:[#allocation7 + $0xf0] sm:$0xff]
          %v2511 = vld [vmem:[#allocation7 + $0xf8] sm:$0xff]
          %v2512 = vld [vmem:[#allocation7 + $0x100] sm:$0xff]
          %v2513 = vld [vmem:[#allocation7 + $0x108] sm:$0xff]
          %v2514 = vld [vmem:[#allocation7 + $0x110] sm:$0xff]
          %v2515 = vld [vmem:[#allocation7 + $0x118] sm:$0xff]
          %v2516 = vld [vmem:[#allocation7 + $0x120] sm:$0xff]
          %v2517 = vld [vmem:[#allocation7 + $0x128] sm:$0xff]
          %v2518 = vld [vmem:[#allocation7 + $0x130] sm:$0xff]
          %v2519 = vld [vmem:[#allocation7 + $0x138] sm:$0xff]
          %v2520 = vld [vmem:[#allocation7 + $0x140] sm:$0xff]
          %v2521 = vld [vmem:[#allocation7 + $0x148] sm:$0xff]
          %v2522 = vld [vmem:[#allocation7 + $0x150] sm:$0xff]
          %v2523 = vld [vmem:[#allocation7 + $0x158] sm:$0xff]
          %v2524 = vld [vmem:[#allocation7 + $0x160] sm:$0xff]
          %v2525 = vld [vmem:[#allocation7 + $0x168] sm:$0xff]
          %v2526 = vld [vmem:[#allocation7 + $0x170] sm:$0xff]
          %v2527 = vld [vmem:[#allocation7 + $0x178] sm:$0xff]
          %v2528 = vld [vmem:[#allocation7 + $0x180] sm:$0xff]
          %v2529 = vld [vmem:[#allocation7 + $0x188] sm:$0xff]
          %v2530 = vld [vmem:[#allocation7 + $0x190] sm:$0xff]
          %v2531 = vld [vmem:[#allocation7 + $0x198] sm:$0xff]
          %v2532 = vld [vmem:[#allocation7 + $0x1a0] sm:$0xff]
          %v2533 = vld [vmem:[#allocation7 + $0x1a8] sm:$0xff]
          %v2534 = vld [vmem:[#allocation7 + $0x1b0] sm:$0xff]
          %v2535 = vld [vmem:[#allocation7 + $0x1b8] sm:$0xff]
          %v2536 = vld [vmem:[#allocation7 + $0x1c0] sm:$0xff]
          %v2537 = vld [vmem:[#allocation7 + $0x1c8] sm:$0xff]
          %v2538 = vld [vmem:[#allocation7 + $0x1d0] sm:$0xff]
          %v2539 = vld [vmem:[#allocation7 + $0x1d8] sm:$0xff]
          %v2540 = vld [vmem:[#allocation7 + $0x1e0] sm:$0xff]
          %v2541 = vld [vmem:[#allocation7 + $0x1e8] sm:$0xff]
          %v2542 = vld [vmem:[#allocation7 + $0x1f0] sm:$0xff]
          %v2543 = vld [vmem:[#allocation7 + $0x1f8] sm:$0xff]
          %v2544 = vld [vmem:[%s6] sm:$0x3]
          %v2546 = vlaneseq
          %v2547 = vshrl.u32 %v2546, 7
          %v2548 = vsub.s32 0, %v2547
          %v2549 = vrot.slane %v2544, %v2548
          %v2550 = vlaneseq
          %v2551 = vshrl.u32 %v2550, 7
          %v2552 = vsub.s32 1, %v2551
          %v2553 = vrot.slane %v2544, %v2552
          %v2620 = vunpack.c.l.b16 %v2480
          %v2621 = vunpack.c.h.b16 %v2480
          %v2622 = vunpack.c.l.b16 %v2481
          %v2623 = vunpack.c.h.b16 %v2481
          %v2624 = vunpack.c.l.b16 %v2482
          %v2625 = vunpack.c.h.b16 %v2482
          %v2626 = vunpack.c.l.b16 %v2483
          %v2627 = vunpack.c.h.b16 %v2483
          %v2628 = vunpack.c.l.b16 %v2484
          %v2629 = vunpack.c.h.b16 %v2484
          %v2630 = vunpack.c.l.b16 %v2485
          %v2631 = vunpack.c.h.b16 %v2485
          %v2632 = vunpack.c.l.b16 %v2486
          %v2633 = vunpack.c.h.b16 %v2486
          %v2634 = vunpack.c.l.b16 %v2487
          %v2635 = vunpack.c.h.b16 %v2487
          %v2636 = vunpack.c.l.b16 %v2488
          %v2637 = vunpack.c.h.b16 %v2488
          %v2638 = vunpack.c.l.b16 %v2489
          %v2639 = vunpack.c.h.b16 %v2489
          %v2640 = vunpack.c.l.b16 %v2490
          %v2641 = vunpack.c.h.b16 %v2490
          %v2642 = vunpack.c.l.b16 %v2491
          %v2643 = vunpack.c.h.b16 %v2491
          %v2644 = vunpack.c.l.b16 %v2492
          %v2645 = vunpack.c.h.b16 %v2492
          %v2646 = vunpack.c.l.b16 %v2493
          %v2647 = vunpack.c.h.b16 %v2493
          %v2648 = vunpack.c.l.b16 %v2494
          %v2649 = vunpack.c.h.b16 %v2494
          %v2650 = vunpack.c.l.b16 %v2495
          %v2651 = vunpack.c.h.b16 %v2495
          %v2652 = vunpack.c.l.b16 %v2496
          %v2653 = vunpack.c.h.b16 %v2496
          %v2654 = vunpack.c.l.b16 %v2497
          %v2655 = vunpack.c.h.b16 %v2497
          %v2656 = vunpack.c.l.b16 %v2498
          %v2657 = vunpack.c.h.b16 %v2498
          %v2658 = vunpack.c.l.b16 %v2499
          %v2659 = vunpack.c.h.b16 %v2499
          %v2660 = vunpack.c.l.b16 %v2500
          %v2661 = vunpack.c.h.b16 %v2500
          %v2662 = vunpack.c.l.b16 %v2501
          %v2663 = vunpack.c.h.b16 %v2501
          %v2664 = vunpack.c.l.b16 %v2502
          %v2665 = vunpack.c.h.b16 %v2502
          %v2666 = vunpack.c.l.b16 %v2503
          %v2667 = vunpack.c.h.b16 %v2503
          %v2668 = vunpack.c.l.b16 %v2504
          %v2669 = vunpack.c.h.b16 %v2504
          %v2670 = vunpack.c.l.b16 %v2505
          %v2671 = vunpack.c.h.b16 %v2505
          %v2672 = vunpack.c.l.b16 %v2506
          %v2673 = vunpack.c.h.b16 %v2506
          %v2674 = vunpack.c.l.b16 %v2507
          %v2675 = vunpack.c.h.b16 %v2507
          %v2676 = vunpack.c.l.b16 %v2508
          %v2677 = vunpack.c.h.b16 %v2508
          %v2678 = vunpack.c.l.b16 %v2509
          %v2679 = vunpack.c.h.b16 %v2509
          %v2680 = vunpack.c.l.b16 %v2510
          %v2681 = vunpack.c.h.b16 %v2510
          %v2682 = vunpack.c.l.b16 %v2511
          %v2683 = vunpack.c.h.b16 %v2511
          %v2684 = vunpack.c.l.b16 %v2512
          %v2685 = vunpack.c.h.b16 %v2512
          %v2686 = vunpack.c.l.b16 %v2513
          %v2687 = vunpack.c.h.b16 %v2513
          %v2688 = vunpack.c.l.b16 %v2514
          %v2689 = vunpack.c.h.b16 %v2514
          %v2690 = vunpack.c.l.b16 %v2515
          %v2691 = vunpack.c.h.b16 %v2515
          %v2692 = vunpack.c.l.b16 %v2516
          %v2693 = vunpack.c.h.b16 %v2516
          %v2694 = vunpack.c.l.b16 %v2517
          %v2695 = vunpack.c.h.b16 %v2517
          %v2696 = vunpack.c.l.b16 %v2518
          %v2697 = vunpack.c.h.b16 %v2518
          %v2698 = vunpack.c.l.b16 %v2519
          %v2699 = vunpack.c.h.b16 %v2519
          %v2700 = vunpack.c.l.b16 %v2520
          %v2701 = vunpack.c.h.b16 %v2520
          %v2702 = vunpack.c.l.b16 %v2521
          %v2703 = vunpack.c.h.b16 %v2521
          %v2704 = vunpack.c.l.b16 %v2522
          %v2705 = vunpack.c.h.b16 %v2522
          %v2706 = vunpack.c.l.b16 %v2523
          %v2707 = vunpack.c.h.b16 %v2523
          %v2708 = vunpack.c.l.b16 %v2524
          %v2709 = vunpack.c.h.b16 %v2524
          %v2710 = vunpack.c.l.b16 %v2525
          %v2711 = vunpack.c.h.b16 %v2525
          %v2712 = vunpack.c.l.b16 %v2526
          %v2713 = vunpack.c.h.b16 %v2526
          %v2714 = vunpack.c.l.b16 %v2527
          %v2715 = vunpack.c.h.b16 %v2527
          %v2716 = vunpack.c.l.b16 %v2528
          %v2717 = vunpack.c.h.b16 %v2528
          %v2718 = vunpack.c.l.b16 %v2529
          %v2719 = vunpack.c.h.b16 %v2529
          %v2720 = vunpack.c.l.b16 %v2530
          %v2721 = vunpack.c.h.b16 %v2530
          %v2722 = vunpack.c.l.b16 %v2531
          %v2723 = vunpack.c.h.b16 %v2531
          %v2724 = vunpack.c.l.b16 %v2532
          %v2725 = vunpack.c.h.b16 %v2532
          %v2726 = vunpack.c.l.b16 %v2533
          %v2727 = vunpack.c.h.b16 %v2533
          %v2728 = vunpack.c.l.b16 %v2534
          %v2729 = vunpack.c.h.b16 %v2534
          %v2730 = vunpack.c.l.b16 %v2535
          %v2731 = vunpack.c.h.b16 %v2535
          %v2732 = vunpack.c.l.b16 %v2536
          %v2733 = vunpack.c.h.b16 %v2536
          %v2734 = vunpack.c.l.b16 %v2537
          %v2735 = vunpack.c.h.b16 %v2537
          %v2736 = vunpack.c.l.b16 %v2538
          %v2737 = vunpack.c.h.b16 %v2538
          %v2738 = vunpack.c.l.b16 %v2539
          %v2739 = vunpack.c.h.b16 %v2539
          %v2740 = vunpack.c.l.b16 %v2540
          %v2741 = vunpack.c.h.b16 %v2540
          %v2742 = vunpack.c.l.b16 %v2541
          %v2743 = vunpack.c.h.b16 %v2541
          %v2744 = vunpack.c.l.b16 %v2542
          %v2745 = vunpack.c.h.b16 %v2542
          %v2746 = vunpack.c.l.b16 %v2543
          %v2747 = vunpack.c.h.b16 %v2543
          %v2748 = vpack.c.b16 %v2622, %v2620
          %v2749 = vpack.c.b16 %v2623, %v2621
          %v2750 = vpack.c.b16 %v2626, %v2624
          %v2751 = vpack.c.b16 %v2627, %v2625
          %v2752 = vpack.c.b16 %v2630, %v2628
          %v2753 = vpack.c.b16 %v2631, %v2629
          %v2754 = vpack.c.b16 %v2634, %v2632
          %v2755 = vpack.c.b16 %v2635, %v2633
          %v2756 = vpack.c.b16 %v2638, %v2636
          %v2757 = vpack.c.b16 %v2639, %v2637
          %v2758 = vpack.c.b16 %v2642, %v2640
          %v2759 = vpack.c.b16 %v2643, %v2641
          %v2760 = vpack.c.b16 %v2646, %v2644
          %v2761 = vpack.c.b16 %v2647, %v2645
          %v2762 = vpack.c.b16 %v2650, %v2648
          %v2763 = vpack.c.b16 %v2651, %v2649
          %v2764 = vpack.c.b16 %v2654, %v2652
          %v2765 = vpack.c.b16 %v2655, %v2653
          %v2766 = vpack.c.b16 %v2658, %v2656
          %v2767 = vpack.c.b16 %v2659, %v2657
          %v2768 = vpack.c.b16 %v2662, %v2660
          %v2769 = vpack.c.b16 %v2663, %v2661
          %v2770 = vpack.c.b16 %v2666, %v2664
          %v2771 = vpack.c.b16 %v2667, %v2665
          %v2772 = vpack.c.b16 %v2670, %v2668
          %v2773 = vpack.c.b16 %v2671, %v2669
          %v2774 = vpack.c.b16 %v2674, %v2672
          %v2775 = vpack.c.b16 %v2675, %v2673
          %v2776 = vpack.c.b16 %v2678, %v2676
          %v2777 = vpack.c.b16 %v2679, %v2677
          %v2778 = vpack.c.b16 %v2682, %v2680
          %v2779 = vpack.c.b16 %v2683, %v2681
          %v2780 = vpack.c.b16 %v2686, %v2684
          %v2781 = vpack.c.b16 %v2687, %v2685
          %v2782 = vpack.c.b16 %v2690, %v2688
          %v2783 = vpack.c.b16 %v2691, %v2689
          %v2784 = vpack.c.b16 %v2694, %v2692
          %v2785 = vpack.c.b16 %v2695, %v2693
          %v2786 = vpack.c.b16 %v2698, %v2696
          %v2787 = vpack.c.b16 %v2699, %v2697
          %v2788 = vpack.c.b16 %v2702, %v2700
          %v2789 = vpack.c.b16 %v2703, %v2701
          %v2790 = vpack.c.b16 %v2706, %v2704
          %v2791 = vpack.c.b16 %v2707, %v2705
          %v2792 = vpack.c.b16 %v2710, %v2708
          %v2793 = vpack.c.b16 %v2711, %v2709
          %v2794 = vpack.c.b16 %v2714, %v2712
          %v2795 = vpack.c.b16 %v2715, %v2713
          %v2796 = vpack.c.b16 %v2718, %v2716
          %v2797 = vpack.c.b16 %v2719, %v2717
          %v2798 = vpack.c.b16 %v2722, %v2720
          %v2799 = vpack.c.b16 %v2723, %v2721
          %v2800 = vpack.c.b16 %v2726, %v2724
          %v2801 = vpack.c.b16 %v2727, %v2725
          %v2802 = vpack.c.b16 %v2730, %v2728
          %v2803 = vpack.c.b16 %v2731, %v2729
          %v2804 = vpack.c.b16 %v2734, %v2732
          %v2805 = vpack.c.b16 %v2735, %v2733
          %v2806 = vpack.c.b16 %v2738, %v2736
          %v2807 = vpack.c.b16 %v2739, %v2737
          %v2808 = vpack.c.b16 %v2742, %v2740
          %v2809 = vpack.c.b16 %v2743, %v2741
          %v2810 = vpack.c.b16 %v2746, %v2744
          %v2811 = vpack.c.b16 %v2747, %v2745
          %2876 = vmatprep.subr.bf16.mxu0 %v2749
          %2877 = vmatpush1.bf16.msra.mxu0 %v2748
          %2878 = vmatprep.subr.bf16.mxu0 %v2751
          %2879 = vmatpush1.bf16.msra.mxu0 %v2750
          %2880 = vmatprep.subr.bf16.mxu0 %v2753
          %2881 = vmatpush1.bf16.msra.mxu0 %v2752
          %2882 = vmatprep.subr.bf16.mxu0 %v2755
          %2883 = vmatpush1.bf16.msra.mxu0 %v2754
          %2884 = vmatprep.subr.bf16.mxu0 %v2757
          %2885 = vmatpush1.bf16.msra.mxu0 %v2756
          %2886 = vmatprep.subr.bf16.mxu0 %v2759
          %2887 = vmatpush1.bf16.msra.mxu0 %v2758
          %2888 = vmatprep.subr.bf16.mxu0 %v2761
          %2889 = vmatpush1.bf16.msra.mxu0 %v2760
          %2890 = vmatprep.subr.bf16.mxu0 %v2763
          %2891 = vmatpush1.bf16.msra.mxu0 %v2762
          %2892 = vmatprep.subr.bf16.mxu0 %v2765
          %2893 = vmatpush1.bf16.msra.mxu0 %v2764
          %2894 = vmatprep.subr.bf16.mxu0 %v2767
          %2895 = vmatpush1.bf16.msra.mxu0 %v2766
          %2896 = vmatprep.subr.bf16.mxu0 %v2769
          %2897 = vmatpush1.bf16.msra.mxu0 %v2768
          %2898 = vmatprep.subr.bf16.mxu0 %v2771
          %2899 = vmatpush1.bf16.msra.mxu0 %v2770
          %2900 = vmatprep.subr.bf16.mxu0 %v2773
          %2901 = vmatpush1.bf16.msra.mxu0 %v2772
          %2902 = vmatprep.subr.bf16.mxu0 %v2775
          %2903 = vmatpush1.bf16.msra.mxu0 %v2774
          %2904 = vmatprep.subr.bf16.mxu0 %v2777
          %2905 = vmatpush1.bf16.msra.mxu0 %v2776
          %2906 = vmatprep.subr.bf16.mxu0 %v2779
          %2907 = vmatpush1.bf16.msra.mxu0 %v2778
          %2908 = vmatprep.mubr.bf16.mxu0 %v2477
          %2909 = vmatmul.mubr.bf16.gmra.mrb[0].mxu0 %v2476
          %v2910 = vpop.f32.mrb[0].mxu0
          %v2911 = vadd.f32 %v2549, %v2910
          %v2912 = vpop.f32.mrb[0].mxu0
          %v2913 = vadd.f32 %v2553, %v2912
          %v2914 = vpop.f32.mrb[0].mxu0
          %v2915 = vpop.f32.mrb[0].mxu0
          %2916 = vdwg.mxu0
          %2917 = vmatprep.subr.bf16.mxu0 %v2781
          %2918 = vmatpush1.bf16.msra.mxu0 %v2780
          %2919 = vmatprep.subr.bf16.mxu0 %v2783
          %2920 = vmatpush1.bf16.msra.mxu0 %v2782
          %2921 = vmatprep.subr.bf16.mxu0 %v2785
          %2922 = vmatpush1.bf16.msra.mxu0 %v2784
          %2923 = vmatprep.subr.bf16.mxu0 %v2787
          %2924 = vmatpush1.bf16.msra.mxu0 %v2786
          %2925 = vmatprep.subr.bf16.mxu0 %v2789
          %2926 = vmatpush1.bf16.msra.mxu0 %v2788
          %2927 = vmatprep.subr.bf16.mxu0 %v2791
          %2928 = vmatpush1.bf16.msra.mxu0 %v2790
          %2929 = vmatprep.subr.bf16.mxu0 %v2793
          %2930 = vmatpush1.bf16.msra.mxu0 %v2792
          %2931 = vmatprep.subr.bf16.mxu0 %v2795
          %2932 = vmatpush1.bf16.msra.mxu0 %v2794
          %2933 = vmatprep.subr.bf16.mxu0 %v2797
          %2934 = vmatpush1.bf16.msra.mxu0 %v2796
          %2935 = vmatprep.subr.bf16.mxu0 %v2799
          %2936 = vmatpush1.bf16.msra.mxu0 %v2798
          %2937 = vmatprep.subr.bf16.mxu0 %v2801
          %2938 = vmatpush1.bf16.msra.mxu0 %v2800
          %2939 = vmatprep.subr.bf16.mxu0 %v2803
          %2940 = vmatpush1.bf16.msra.mxu0 %v2802
          %2941 = vmatprep.subr.bf16.mxu0 %v2805
          %2942 = vmatpush1.bf16.msra.mxu0 %v2804
          %2943 = vmatprep.subr.bf16.mxu0 %v2807
          %2944 = vmatpush1.bf16.msra.mxu0 %v2806
          %2945 = vmatprep.subr.bf16.mxu0 %v2809
          %2946 = vmatpush1.bf16.msra.mxu0 %v2808
          %2947 = vmatprep.subr.bf16.mxu0 %v2811
          %2948 = vmatpush1.bf16.msra.mxu0 %v2810
          %2949 = vmatprep.mubr.bf16.mxu0 %v2479
          %2950 = vmatmul.mubr.bf16.gmra.mrb[0].mxu0 %v2478
          %v2951 = vpop.f32.mrb[0].mxu0
          %v2952 = vadd.f32 %v2911, %v2951
          %v2953 = vpop.f32.mrb[0].mxu0
          %v2954 = vadd.f32 %v2913, %v2953
          %v2955 = vpop.f32.mrb[0].mxu0
          %v2956 = vpop.f32.mrb[0].mxu0
          %2957 = vdwg.mxu0
          %v2958 = vmax.f32 %v2952, 0.0
          %v2959 = vmax.f32 %v2954, 0.0
          %v2960 = vpack.c.bf16 %v2958, %v2958
          %v2961 = vpack.c.bf16 %v2959, %v2959
          %v2962 = vld [vmem:[%s7] sm:$0xff]
          %v2963 = vld [vmem:[%s7 + $0x8] sm:$0xff]
          %v2964 = vld [vmem:[%s7 + $0x10] sm:$0xff]
          %v2965 = vld [vmem:[%s7 + $0x18] sm:$0xff]
          %v2966 = vld [vmem:[%s7 + $0x20] sm:$0xff]
          %v2967 = vld [vmem:[%s7 + $0x28] sm:$0xff]
          %v2968 = vld [vmem:[%s7 + $0x30] sm:$0xff]
          %v2969 = vld [vmem:[%s7 + $0x38] sm:$0xff]
          %v2970 = vld [vmem:[%s7 + $0x40] sm:$0xff]
          %v2971 = vld [vmem:[%s7 + $0x48] sm:$0xff]
          %v2972 = vld [vmem:[%s7 + $0x50] sm:$0xff]
          %v2973 = vld [vmem:[%s7 + $0x58] sm:$0xff]
          %v2974 = vld [vmem:[%s7 + $0x60] sm:$0xff]
          %v2975 = vld [vmem:[%s7 + $0x68] sm:$0xff]
          %v2976 = vld [vmem:[%s7 + $0x70] sm:$0xff]
          %v2977 = vld [vmem:[%s7 + $0x78] sm:$0xff]
          %v2978 = vld [vmem:[%s7 + $0x80] sm:$0xff]
          %v2979 = vld [vmem:[%s7 + $0x88] sm:$0xff]
          %v2980 = vld [vmem:[%s7 + $0x90] sm:$0xff]
          %v2981 = vld [vmem:[%s7 + $0x98] sm:$0xff]
          %v2982 = vld [vmem:[%s7 + $0xa0] sm:$0xff]
          %v2983 = vld [vmem:[%s7 + $0xa8] sm:$0xff]
          %v2984 = vld [vmem:[%s7 + $0xb0] sm:$0xff]
          %v2985 = vld [vmem:[%s7 + $0xb8] sm:$0xff]
          %v2986 = vld [vmem:[%s7 + $0xc0] sm:$0xff]
          %v2987 = vld [vmem:[%s7 + $0xc8] sm:$0xff]
          %v2988 = vld [vmem:[%s7 + $0xd0] sm:$0xff]
          %v2989 = vld [vmem:[%s7 + $0xd8] sm:$0xff]
          %v2990 = vld [vmem:[%s7 + $0xe0] sm:$0xff]
          %v2991 = vld [vmem:[%s7 + $0xe8] sm:$0xff]
          %v2992 = vld [vmem:[%s7 + $0xf0] sm:$0xff]
          %v2993 = vld [vmem:[%s7 + $0xf8] sm:$0xff]
          %v2994 = vld [vmem:[%s8] sm:$0x3]
          %v2996 = vlaneseq
          %v2997 = vshrl.u32 %v2996, 7
          %v2998 = vsub.s32 0, %v2997
          %v2999 = vrot.slane %v2994, %v2998
          %v3000 = vlaneseq
          %v3001 = vshrl.u32 %v3000, 7
          %v3002 = vsub.s32 1, %v3001
          %v3003 = vrot.slane %v2994, %v3002
          %v3038 = vunpack.c.l.b16 %v2962
          %v3039 = vunpack.c.h.b16 %v2962
          %v3040 = vunpack.c.l.b16 %v2963
          %v3041 = vunpack.c.h.b16 %v2963
          %v3042 = vunpack.c.l.b16 %v2964
          %v3043 = vunpack.c.h.b16 %v2964
          %v3044 = vunpack.c.l.b16 %v2965
          %v3045 = vunpack.c.h.b16 %v2965
          %v3046 = vunpack.c.l.b16 %v2966
          %v3047 = vunpack.c.h.b16 %v2966
          %v3048 = vunpack.c.l.b16 %v2967
          %v3049 = vunpack.c.h.b16 %v2967
          %v3050 = vunpack.c.l.b16 %v2968
          %v3051 = vunpack.c.h.b16 %v2968
          %v3052 = vunpack.c.l.b16 %v2969
          %v3053 = vunpack.c.h.b16 %v2969
          %v3054 = vunpack.c.l.b16 %v2970
          %v3055 = vunpack.c.h.b16 %v2970
          %v3056 = vunpack.c.l.b16 %v2971
          %v3057 = vunpack.c.h.b16 %v2971
          %v3058 = vunpack.c.l.b16 %v2972
          %v3059 = vunpack.c.h.b16 %v2972
          %v3060 = vunpack.c.l.b16 %v2973
          %v3061 = vunpack.c.h.b16 %v2973
          %v3062 = vunpack.c.l.b16 %v2974
          %v3063 = vunpack.c.h.b16 %v2974
          %v3064 = vunpack.c.l.b16 %v2975
          %v3065 = vunpack.c.h.b16 %v2975
          %v3066 = vunpack.c.l.b16 %v2976
          %v3067 = vunpack.c.h.b16 %v2976
          %v3068 = vunpack.c.l.b16 %v2977
          %v3069 = vunpack.c.h.b16 %v2977
          %v3070 = vunpack.c.l.b16 %v2978
          %v3071 = vunpack.c.h.b16 %v2978
          %v3072 = vunpack.c.l.b16 %v2979
          %v3073 = vunpack.c.h.b16 %v2979
          %v3074 = vunpack.c.l.b16 %v2980
          %v3075 = vunpack.c.h.b16 %v2980
          %v3076 = vunpack.c.l.b16 %v2981
          %v3077 = vunpack.c.h.b16 %v2981
          %v3078 = vunpack.c.l.b16 %v2982
          %v3079 = vunpack.c.h.b16 %v2982
          %v3080 = vunpack.c.l.b16 %v2983
          %v3081 = vunpack.c.h.b16 %v2983
          %v3082 = vunpack.c.l.b16 %v2984
          %v3083 = vunpack.c.h.b16 %v2984
          %v3084 = vunpack.c.l.b16 %v2985
          %v3085 = vunpack.c.h.b16 %v2985
          %v3086 = vunpack.c.l.b16 %v2986
          %v3087 = vunpack.c.h.b16 %v2986
          %v3088 = vunpack.c.l.b16 %v2987
          %v3089 = vunpack.c.h.b16 %v2987
          %v3090 = vunpack.c.l.b16 %v2988
          %v3091 = vunpack.c.h.b16 %v2988
          %v3092 = vunpack.c.l.b16 %v2989
          %v3093 = vunpack.c.h.b16 %v2989
          %v3094 = vunpack.c.l.b16 %v2990
          %v3095 = vunpack.c.h.b16 %v2990
          %v3096 = vunpack.c.l.b16 %v2991
          %v3097 = vunpack.c.h.b16 %v2991
          %v3098 = vunpack.c.l.b16 %v2992
          %v3099 = vunpack.c.h.b16 %v2992
          %v3100 = vunpack.c.l.b16 %v2993
          %v3101 = vunpack.c.h.b16 %v2993
          %v3102 = vpack.c.b16 %v3040, %v3038
          %v3103 = vpack.c.b16 %v3041, %v3039
          %v3104 = vpack.c.b16 %v3044, %v3042
          %v3105 = vpack.c.b16 %v3045, %v3043
          %v3106 = vpack.c.b16 %v3048, %v3046
          %v3107 = vpack.c.b16 %v3049, %v3047
          %v3108 = vpack.c.b16 %v3052, %v3050
          %v3109 = vpack.c.b16 %v3053, %v3051
          %v3110 = vpack.c.b16 %v3056, %v3054
          %v3111 = vpack.c.b16 %v3057, %v3055
          %v3112 = vpack.c.b16 %v3060, %v3058
          %v3113 = vpack.c.b16 %v3061, %v3059
          %v3114 = vpack.c.b16 %v3064, %v3062
          %v3115 = vpack.c.b16 %v3065, %v3063
          %v3116 = vpack.c.b16 %v3068, %v3066
          %v3117 = vpack.c.b16 %v3069, %v3067
          %v3118 = vpack.c.b16 %v3072, %v3070
          %v3119 = vpack.c.b16 %v3073, %v3071
          %v3120 = vpack.c.b16 %v3076, %v3074
          %v3121 = vpack.c.b16 %v3077, %v3075
          %v3122 = vpack.c.b16 %v3080, %v3078
          %v3123 = vpack.c.b16 %v3081, %v3079
          %v3124 = vpack.c.b16 %v3084, %v3082
          %v3125 = vpack.c.b16 %v3085, %v3083
          %v3126 = vpack.c.b16 %v3088, %v3086
          %v3127 = vpack.c.b16 %v3089, %v3087
          %v3128 = vpack.c.b16 %v3092, %v3090
          %v3129 = vpack.c.b16 %v3093, %v3091
          %v3130 = vpack.c.b16 %v3096, %v3094
          %v3131 = vpack.c.b16 %v3097, %v3095
          %v3132 = vpack.c.b16 %v3100, %v3098
          %v3133 = vpack.c.b16 %v3101, %v3099
          %3166 = vmatprep.subr.bf16.mxu0 %v3103
          %3167 = vmatpush1.bf16.msra.mxu0 %v3102
          %3168 = vmatprep.subr.bf16.mxu0 %v3105
          %3169 = vmatpush1.bf16.msra.mxu0 %v3104
          %3170 = vmatprep.subr.bf16.mxu0 %v3107
          %3171 = vmatpush1.bf16.msra.mxu0 %v3106
          %3172 = vmatprep.subr.bf16.mxu0 %v3109
          %3173 = vmatpush1.bf16.msra.mxu0 %v3108
          %3174 = vmatprep.subr.bf16.mxu0 %v3111
          %3175 = vmatpush1.bf16.msra.mxu0 %v3110
          %3176 = vmatprep.subr.bf16.mxu0 %v3113
          %3177 = vmatpush1.bf16.msra.mxu0 %v3112
          %3178 = vmatprep.subr.bf16.mxu0 %v3115
          %3179 = vmatpush1.bf16.msra.mxu0 %v3114
          %3180 = vmatprep.subr.bf16.mxu0 %v3117
          %3181 = vmatpush1.bf16.msra.mxu0 %v3116
          %3182 = vmatprep.subr.bf16.mxu0 %v3119
          %3183 = vmatpush1.bf16.msra.mxu0 %v3118
          %3184 = vmatprep.subr.bf16.mxu0 %v3121
          %3185 = vmatpush1.bf16.msra.mxu0 %v3120
          %3186 = vmatprep.subr.bf16.mxu0 %v3123
          %3187 = vmatpush1.bf16.msra.mxu0 %v3122
          %3188 = vmatprep.subr.bf16.mxu0 %v3125
          %3189 = vmatpush1.bf16.msra.mxu0 %v3124
          %3190 = vmatprep.subr.bf16.mxu0 %v3127
          %3191 = vmatpush1.bf16.msra.mxu0 %v3126
          %3192 = vmatprep.subr.bf16.mxu0 %v3129
          %3193 = vmatpush1.bf16.msra.mxu0 %v3128
          %3194 = vmatprep.subr.bf16.mxu0 %v3131
          %3195 = vmatpush1.bf16.msra.mxu0 %v3130
          %3196 = vmatprep.subr.bf16.mxu0 %v3133
          %3197 = vmatpush1.bf16.msra.mxu0 %v3132
          %3198 = vmatprep.mubr.bf16.mxu0 %v2961
          %3199 = vmatmul.mubr.bf16.gmra.mrb[0].mxu0 %v2960
          %v3200 = vpop.f32.mrb[0].mxu0
          %v3201 = vadd.f32 %v2999, %v3200
          %v3202 = vpop.f32.mrb[0].mxu0
          %v3203 = vadd.f32 %v3003, %v3202
          %v3204 = vpop.f32.mrb[0].mxu0
          %v3205 = vpop.f32.mrb[0].mxu0
          %3206 = vdwg.mxu0
          %v3207 = vpack.c.bf16 %v3201, %v3201
          %v3208 = vpack.c.bf16 %v3203, %v3203
          %v3209 = vld [vmem:[#allocation8] sm:$0xf]
          %v3210 = vld [vmem:[#allocation8 + $0x4] sm:$0xf]
          %v3211 = vld [vmem:[#allocation8 + $0x8] sm:$0xf]
          %v3212 = vld [vmem:[#allocation8 + $0xc] sm:$0xf]
          %v3213 = vld [vmem:[#allocation8 + $0x10] sm:$0xf]
          %v3214 = vld [vmem:[#allocation8 + $0x14] sm:$0xf]
          %v3215 = vld [vmem:[#allocation8 + $0x18] sm:$0xf]
          %v3216 = vld [vmem:[#allocation8 + $0x1c] sm:$0xf]
          %v3217 = vld [vmem:[#allocation8 + $0x20] sm:$0xf]
          %v3218 = vld [vmem:[#allocation8 + $0x24] sm:$0xf]
          %v3219 = vld [vmem:[#allocation8 + $0x28] sm:$0xf]
          %v3220 = vld [vmem:[#allocation8 + $0x2c] sm:$0xf]
          %v3221 = vld [vmem:[#allocation8 + $0x30] sm:$0xf]
          %v3222 = vld [vmem:[#allocation8 + $0x34] sm:$0xf]
          %v3223 = vld [vmem:[#allocation8 + $0x38] sm:$0xf]
          %v3224 = vld [vmem:[#allocation8 + $0x3c] sm:$0xf]
          %v3225 = vld [vmem:[#allocation8 + $0x40] sm:$0xf]
          %v3226 = vld [vmem:[#allocation8 + $0x44] sm:$0xf]
          %v3227 = vld [vmem:[#allocation8 + $0x48] sm:$0xf]
          %v3228 = vld [vmem:[#allocation8 + $0x4c] sm:$0xf]
          %v3229 = vld [vmem:[#allocation8 + $0x50] sm:$0xf]
          %v3230 = vld [vmem:[#allocation8 + $0x54] sm:$0xf]
          %v3231 = vld [vmem:[#allocation8 + $0x58] sm:$0xf]
          %v3232 = vld [vmem:[#allocation8 + $0x5c] sm:$0xf]
          %v3233 = vld [vmem:[#allocation8 + $0x60] sm:$0xf]
          %v3234 = vld [vmem:[#allocation8 + $0x64] sm:$0xf]
          %v3235 = vld [vmem:[#allocation8 + $0x68] sm:$0xf]
          %v3236 = vld [vmem:[#allocation8 + $0x6c] sm:$0xf]
          %v3237 = vld [vmem:[#allocation8 + $0x70] sm:$0xf]
          %v3238 = vld [vmem:[#allocation8 + $0x74] sm:$0xf]
          %v3239 = vld [vmem:[#allocation8 + $0x78] sm:$0xf]
          %v3240 = vld [vmem:[#allocation8 + $0x7c] sm:$0xf]
          %v3241 = vld [vmem:[%s10] sm:$0x1]
          %v3243 = vlaneseq
          %v3244 = vshrl.u32 %v3243, 7
          %v3245 = vsub.s32 0, %v3244
          %v3246 = vrot.slane %v3241, %v3245
          %v3280 = vunpack.c.l.b16 %v3209
          %v3281 = vunpack.c.l.b16 %v3210
          %v3282 = vunpack.c.l.b16 %v3211
          %v3283 = vunpack.c.l.b16 %v3212
          %v3284 = vunpack.c.l.b16 %v3213
          %v3285 = vunpack.c.l.b16 %v3214
          %v3286 = vunpack.c.l.b16 %v3215
          %v3287 = vunpack.c.l.b16 %v3216
          %v3288 = vunpack.c.l.b16 %v3217
          %v3289 = vunpack.c.l.b16 %v3218
          %v3290 = vunpack.c.l.b16 %v3219
          %v3291 = vunpack.c.l.b16 %v3220
          %v3292 = vunpack.c.l.b16 %v3221
          %v3293 = vunpack.c.l.b16 %v3222
          %v3294 = vunpack.c.l.b16 %v3223
          %v3295 = vunpack.c.l.b16 %v3224
          %v3296 = vunpack.c.l.b16 %v3225
          %v3297 = vunpack.c.l.b16 %v3226
          %v3298 = vunpack.c.l.b16 %v3227
          %v3299 = vunpack.c.l.b16 %v3228
          %v3300 = vunpack.c.l.b16 %v3229
          %v3301 = vunpack.c.l.b16 %v3230
          %v3302 = vunpack.c.l.b16 %v3231
          %v3303 = vunpack.c.l.b16 %v3232
          %v3304 = vunpack.c.l.b16 %v3233
          %v3305 = vunpack.c.l.b16 %v3234
          %v3306 = vunpack.c.l.b16 %v3235
          %v3307 = vunpack.c.l.b16 %v3236
          %v3308 = vunpack.c.l.b16 %v3237
          %v3309 = vunpack.c.l.b16 %v3238
          %v3310 = vunpack.c.l.b16 %v3239
          %v3311 = vunpack.c.l.b16 %v3240
          %v3312 = vpack.c.b16 %v3281, %v3280
          %v3313 = vpack.c.b16 %v3283, %v3282
          %v3314 = vpack.c.b16 %v3285, %v3284
          %v3315 = vpack.c.b16 %v3287, %v3286
          %v3316 = vpack.c.b16 %v3289, %v3288
          %v3317 = vpack.c.b16 %v3291, %v3290
          %v3318 = vpack.c.b16 %v3293, %v3292
          %v3319 = vpack.c.b16 %v3295, %v3294
          %v3320 = vpack.c.b16 %v3297, %v3296
          %v3321 = vpack.c.b16 %v3299, %v3298
          %v3322 = vpack.c.b16 %v3301, %v3300
          %v3323 = vpack.c.b16 %v3303, %v3302
          %v3324 = vpack.c.b16 %v3305, %v3304
          %v3325 = vpack.c.b16 %v3307, %v3306
          %v3326 = vpack.c.b16 %v3309, %v3308
          %v3327 = vpack.c.b16 %v3311, %v3310
          %3344 = vmatprep.subr.bf16.mxu0 0
          %3345 = vmatpush1.bf16.msra.mxu0 %v3312
          %3346 = vmatprep.subr.bf16.mxu0 0
          %3347 = vmatpush1.bf16.msra.mxu0 %v3313
          %3348 = vmatprep.subr.bf16.mxu0 0
          %3349 = vmatpush1.bf16.msra.mxu0 %v3314
          %3350 = vmatprep.subr.bf16.mxu0 0
          %3351 = vmatpush1.bf16.msra.mxu0 %v3315
          %3352 = vmatprep.subr.bf16.mxu0 0
          %3353 = vmatpush1.bf16.msra.mxu0 %v3316
          %3354 = vmatprep.subr.bf16.mxu0 0
          %3355 = vmatpush1.bf16.msra.mxu0 %v3317
          %3356 = vmatprep.subr.bf16.mxu0 0
          %3357 = vmatpush1.bf16.msra.mxu0 %v3318
          %3358 = vmatprep.subr.bf16.mxu0 0
          %3359 = vmatpush1.bf16.msra.mxu0 %v3319
          %3360 = vmatprep.subr.bf16.mxu0 0
          %3361 = vmatpush1.bf16.msra.mxu0 %v3320
          %3362 = vmatprep.subr.bf16.mxu0 0
          %3363 = vmatpush1.bf16.msra.mxu0 %v3321
          %3364 = vmatprep.subr.bf16.mxu0 0
          %3365 = vmatpush1.bf16.msra.mxu0 %v3322
          %3366 = vmatprep.subr.bf16.mxu0 0
          %3367 = vmatpush1.bf16.msra.mxu0 %v3323
          %3368 = vmatprep.subr.bf16.mxu0 0
          %3369 = vmatpush1.bf16.msra.mxu0 %v3324
          %3370 = vmatprep.subr.bf16.mxu0 0
          %3371 = vmatpush1.bf16.msra.mxu0 %v3325
          %3372 = vmatprep.subr.bf16.mxu0 0
          %3373 = vmatpush1.bf16.msra.mxu0 %v3326
          %3374 = vmatprep.subr.bf16.mxu0 0
          %3375 = vmatpush1.bf16.msra.mxu0 %v3327
          %3376 = vmatprep.mubr.bf16.mxu0 %v3208
          %3377 = vmatmul.mubr.bf16.gmra.mrb[0].mxu0 %v3207
          %v3378 = vpop.f32.mrb[0].mxu0
          %v3379 = vadd.f32 %v3246, %v3378
          %v3380 = vpop.f32.mrb[0].mxu0
          %v3381 = vpop.f32.mrb[0].mxu0
          %v3382 = vpop.f32.mrb[0].mxu0
          %3383 = vdwg.mxu0
          %3384 = vst [vmem:[%s11] sm:$0x3] %v3379
        $region88: #{mt_classifier_3d_forward.1} parent=63 // pred_fallthru
          _
        // Predicated region
        $region89: #{mt_classifier_3d_forward.1} parent=63 // pred_check
          %p3385 = pneg %p281
        $region90: #{mt_classifier_3d_forward.1} parent=63 // pred_check_branch
          %3387 = sbr.rel (%p3385) target = $region92
        $region91: #{mt_classifier_3d_forward.1} parent=63 // pred_region
          _
        $region92: #{mt_classifier_3d_forward.1} parent=63 // pred_fallthru
          _
        // Predicated region
        $region93: #{mt_classifier_3d_forward.1} parent=63 // pred_check
          %p3388 = pneg %p281
        $region94: #{mt_classifier_3d_forward.1} parent=63 // pred_check_branch
          %3390 = sbr.rel (%p3388) target = $region96
        $region95: #{mt_classifier_3d_forward.1} parent=63 // pred_region
          _
        $region96: #{mt_classifier_3d_forward.1} parent=63 // pred_fallthru
          _
      $region64: #{mt_classifier_3d_forward.1} parent=5 // pred_fallthru
        _
      %p3391 = scmp.le.s32.totalorder 2, %s22
      // Predicated region
      $region97: #{mt_classifier_3d_forward.1} parent=5 // pred_check
        %p3392 = pneg %p3391
      $region98: #{mt_classifier_3d_forward.1} parent=5 // pred_check_branch
        %3394 = sbr.rel (%p3392) target = $region100
      $region99: #{mt_classifier_3d_forward.1} parent=5 // pred_region
        %s3395 = ssub.s32 %s22, 2
      $region100: #{mt_classifier_3d_forward.1} parent=5 // pred_fallthru
        _
    $region6: #{mt_classifier_3d_forward.1} parent=1 // loop_footer
      %s26 = sadd.s32 1, %s22
    $region7: #{mt_classifier_3d_forward.1} parent=1 // loop_footer_branch
      %21 = sbr.rel target = $region3
    $region8: #{mt_classifier_3d_forward.1} parent=1 // loop_exit
      _
    %3396 = vsyncpa [#allocation4], 1
    %s3397 = scalar_lea.sflag [#allocation4], 1
    %3398 = vsyncpa %s3397, 1
    %3399 = vsyncpa [#allocation6], 1
    %3400 = vsyncpa [#allocation9], 1

</llo_original>
